<compile_context>
chip_gen: v7x
topology: tpu7x:2x2x1
jax: 0.10.0
libtpu: 0.0.40
codegen_flags: <defaults>
</compile_context>

<pallas_src>
import functools

import jax
import jax.numpy as jnp
import numpy as np
from jax.experimental import pallas as pl
from jax.experimental.pallas import tpu as pltpu


def _final_kernel(x_ref, a1_ref, b1_ref, a2_ref, b2_ref, a3_ref, b3_ref,
                  mask_ref, out_ref, fp1_ref, lhs1_ref, fp2_ref, lhs2_ref,
                  *, width):
    """One batch image: conv3x3 + relu -> conv3x3 + relu -> conv1x1.

    Layout: activations are (C, P) with P = H*W on the lane axis (dense).
    fp*_ref  : (C, P + 2W + 2) flat zero-padded activation (bf16 scratch).
    lhs*_ref : (9C, P) im2col LHS; row block k = tap (dy, dx), k = dy*3 + dx.
    """
    _, c_in, p = x_ref.shape
    hidden = a1_ref.shape[0]
    w = width
    pad = w + 1
    bf16 = jnp.bfloat16

    # Edge-column masks: load each row once (shared by both convs, all taps).
    mask_l = mask_ref[0:1, :]     # zeroes output columns with x == 0     (dx == 0 taps)
    mask_r = mask_ref[1:2, :]     # zeroes output columns with x == W - 1 (dx == 2 taps)

    def build_taps(fp_ref, lhs_ref, c):
        # Tap (dy, dx) of the zero-padded image == contiguous lane slice of the
        # flat-padded buffer at offset dy*W + dx; only the image-edge columns
        # (x==0 for dx==0, x==W-1 for dx==2) need an extra zero mask.
        for k in range(9):
            dy, dx = divmod(k, 3)
            off = dy * w + dx
            tap = fp_ref[:, off:off + p]
            if dx == 0:
                tap = tap * mask_l
            elif dx == 2:
                tap = tap * mask_r
            lhs_ref[k * c:(k + 1) * c, :] = tap

    # ---- conv1: Conv2d(c_in, hidden, 3, padding=1) + ReLU
    zpad1 = jnp.zeros((c_in, pad), bf16)
    fp1_ref[:, :pad] = zpad1                      # halo-only zeroing
    fp1_ref[:, pad + p:] = zpad1
    fp1_ref[:, pad:pad + p] = x_ref[0]            # already bf16 (cast in wrapper)
    build_taps(fp1_ref, lhs1_ref, c_in)
    h1 = jnp.dot(a1_ref[...], lhs1_ref[...],      # (hidden, 9*c_in) x (9*c_in, P)
                 preferred_element_type=jnp.float32)
    h1 = jnp.maximum(h1 + b1_ref[...], 0.0)

    # ---- conv2: Conv2d(hidden, hidden, 3, padding=1) + ReLU
    zpad2 = jnp.zeros((hidden, pad), bf16)
    fp2_ref[:, :pad] = zpad2
    fp2_ref[:, pad + p:] = zpad2
    fp2_ref[:, pad:pad + p] = h1.astype(bf16)
    build_taps(fp2_ref, lhs2_ref, hidden)
    h2 = jnp.dot(a2_ref[...], lhs2_ref[...],      # (hidden, 9*hidden) x (9*hidden, P)
                 preferred_element_type=jnp.float32)
    h2 = jnp.maximum(h2 + b2_ref[...], 0.0)

    # ---- conv3: Conv2d(hidden, c_out, 1)
    y = jnp.dot(a3_ref[...], h2.astype(bf16),     # (c_out, hidden) x (hidden, P)
                preferred_element_type=jnp.float32)
    out_ref[0] = y + b3_ref[...]


@jax.jit
def final_block(x_nchw, params):
    """FinalBlock forward.  x_nchw: [N, Cin, H, W] -> [N, Cout, H, W]."""
    n, c_in, h, w = x_nchw.shape
    hidden = params["w1"].shape[0]
    c_out = params["w3"].shape[0]
    p = h * w
    bf16 = jnp.bfloat16

    # NCHW -> (N, C, H*W): a free reshape, no HBM transpose.  Cast to bf16 in
    # the wrapper so the per-image activation DMA moves half the bytes.
    x = x_nchw.reshape(n, c_in, p).astype(bf16)

    # Weights: (O, I, kh, kw) -> (O, kh*kw*I) matching the kernel's tap order
    # (dy, dx, c); cast once to bf16 (f32 accumulation happens in the dots).
    a1 = jnp.transpose(params["w1"], (0, 2, 3, 1)).reshape(hidden, 9 * c_in).astype(bf16)
    a2 = jnp.transpose(params["w2"], (0, 2, 3, 1)).reshape(hidden, 9 * hidden).astype(bf16)
    a3 = params["w3"].reshape(c_out, hidden).astype(bf16)
    b1 = params["b1"].reshape(hidden, 1).astype(jnp.float32)
    b2 = params["b2"].reshape(hidden, 1).astype(jnp.float32)
    b3 = params["b3"].reshape(c_out, 1).astype(jnp.float32)

    # Edge-column masks (precomputed here so the kernel needs no iota/mod):
    # row 0 zeroes x==0 (used by dx==0 taps), row 1 zeroes x==W-1 (dx==2 taps).
    col = jnp.arange(p, dtype=jnp.int32) % w
    masks = jnp.stack([(col != 0), (col != w - 1)]).astype(bf16)   # (2, P)

    kernel = functools.partial(_final_kernel, width=w)
    out = pl.pallas_call(
        kernel,
        out_shape=jax.ShapeDtypeStruct((n, c_out, p), jnp.float32),
        grid=(n,),
        in_specs=[
            pl.BlockSpec((1, c_in, p), lambda i: (i, 0, 0)),        # x
            pl.BlockSpec((hidden, 9 * c_in), lambda i: (0, 0)),     # a1
            pl.BlockSpec((hidden, 1), lambda i: (0, 0)),            # b1
            pl.BlockSpec((hidden, 9 * hidden), lambda i: (0, 0)),   # a2
            pl.BlockSpec((hidden, 1), lambda i: (0, 0)),            # b2
            pl.BlockSpec((c_out, hidden), lambda i: (0, 0)),        # a3
            pl.BlockSpec((c_out, 1), lambda i: (0, 0)),             # b3
            pl.BlockSpec((2, p), lambda i: (0, 0)),                 # masks
        ],
        out_specs=pl.BlockSpec((1, c_out, p), lambda i: (i, 0, 0)),
        scratch_shapes=[
            pltpu.VMEM((c_in, p + 2 * (w + 1)), bf16),    # flat-padded input
            pltpu.VMEM((9 * c_in, p), bf16),              # im2col LHS, conv1
            pltpu.VMEM((hidden, p + 2 * (w + 1)), bf16),  # flat-padded relu(conv1)
            pltpu.VMEM((9 * hidden, p), bf16),            # im2col LHS, conv2
        ],
        compiler_params=pltpu.CompilerParams(
            dimension_semantics=("parallel",),            # batch across TCs (v7x)
            vmem_limit_bytes=32 * 1024 * 1024,
        ),
    )(x, a1, b1, a2, b2, a3, b3, masks)

    return out.reshape(n, c_out, h, w)


def reference_final_block(x_nchw, params):
    """Pure-JAX reference with the same bf16-operand / f32-accumulate numerics."""
    bf16 = jnp.bfloat16

    def conv(h, w, b):
        o = jax.lax.conv_general_dilated(
            h.astype(bf16), w.astype(bf16), (1, 1), "SAME",
            dimension_numbers=("NCHW", "OIHW", "NCHW"),
            preferred_element_type=jnp.float32)
        return o + b.reshape(1, -1, 1, 1)

    h = jnp.maximum(conv(x_nchw, params["w1"], params["b1"]), 0.0)
    h = jnp.maximum(conv(h, params["w2"], params["b2"]), 0.0)
    return conv(h, params["w3"], params["b3"])


if __name__ == "__main__":
    key = jax.random.PRNGKey(0)
    k_x, *k_p = jax.random.split(key, 8)

    N, C_IN, HIDDEN, C_OUT, H, W = 2, 4, 32, 3, 16, 16
    x = jax.random.normal(k_x, (N, C_IN, H, W), jnp.float32)
    params = {
        "w1": 0.1 * jax.random.normal(k_p[0], (HIDDEN, C_IN, 3, 3), jnp.float32),
        "b1": 0.1 * jax.random.normal(k_p[1], (HIDDEN,), jnp.float32),
        "w2": 0.1 * jax.random.normal(k_p[2], (HIDDEN, HIDDEN, 3, 3), jnp.float32),
        "b2": 0.1 * jax.random.normal(k_p[3], (HIDDEN,), jnp.float32),
        "w3": 0.1 * jax.random.normal(k_p[4], (C_OUT, HIDDEN, 1, 1), jnp.float32),
        "b3": 0.1 * jax.random.normal(k_p[5], (C_OUT,), jnp.float32),
    }

    out = jax.block_until_ready(final_block(x, params))
    assert out.shape == (N, C_OUT, H, W), out.shape

    ref = jax.block_until_ready(reference_final_block(x, params))
    # bf16 operands are rounded identically in kernel and reference; remaining
    # difference is f32 accumulation order, far below this tolerance.
    # (vs. a pure-f32 PyTorch forward the difference is ~bf16 rounding, <1%.)
    np.testing.assert_allclose(np.asarray(out, np.float32),
                               np.asarray(ref, np.float32),
                               rtol=2e-3, atol=2e-3)
    print("KERNEL_OK")
</pallas_src>

<mosaic_0001>
module attributes {stable_mosaic.version = 11 : i64} {
  func.func @_final_kernel(%arg0: i32, %arg1: memref<1x4x256xbf16, #tpu.memory_space<vmem>>, %arg2: memref<32x36xbf16, #tpu.memory_space<vmem>>, %arg3: memref<32x1xf32, #tpu.memory_space<vmem>>, %arg4: memref<32x288xbf16, #tpu.memory_space<vmem>>, %arg5: memref<32x1xf32, #tpu.memory_space<vmem>>, %arg6: memref<3x32xbf16, #tpu.memory_space<vmem>>, %arg7: memref<3x1xf32, #tpu.memory_space<vmem>>, %arg8: memref<2x256xbf16, #tpu.memory_space<vmem>>, %arg9: memref<1x3x256xf32, #tpu.memory_space<vmem>>, %arg10: memref<4x290xbf16, #tpu.memory_space<vmem>>, %arg11: memref<36x256xbf16, #tpu.memory_space<vmem>>, %arg12: memref<32x290xbf16, #tpu.memory_space<vmem>>, %arg13: memref<288x256xbf16, #tpu.memory_space<vmem>>) attributes {dimension_semantics = [#tpu.dimension_semantics<parallel>], iteration_bounds = array<i64: 2>, scalar_prefetch = 0 : i64, scratch_operands = 4 : i64, tpu.core_type = #tpu.core_type<tc>, window_params = [{transform_indices = @transform_0, window_bounds = array<i64: 1, 4, 256>}, {pipeline_mode = #tpu.pipeline_mode<synchronous>, transform_indices = @transform_1, window_bounds = array<i64: 32, 36>}, {pipeline_mode = #tpu.pipeline_mode<synchronous>, transform_indices = @transform_2, window_bounds = array<i64: 32, 1>}, {pipeline_mode = #tpu.pipeline_mode<synchronous>, transform_indices = @transform_3, window_bounds = array<i64: 32, 288>}, {pipeline_mode = #tpu.pipeline_mode<synchronous>, transform_indices = @transform_4, window_bounds = array<i64: 32, 1>}, {pipeline_mode = #tpu.pipeline_mode<synchronous>, transform_indices = @transform_5, window_bounds = array<i64: 3, 32>}, {pipeline_mode = #tpu.pipeline_mode<synchronous>, transform_indices = @transform_6, window_bounds = array<i64: 3, 1>}, {pipeline_mode = #tpu.pipeline_mode<synchronous>, transform_indices = @transform_7, window_bounds = array<i64: 2, 256>}, {transform_indices = @transform_8, window_bounds = array<i64: 1, 3, 256>}]} {
    %c0 = arith.constant 0 : index
    %c0_0 = arith.constant 0 : index
    %0 = vector.load %arg8[%c0, %c0_0] : memref<2x256xbf16, #tpu.memory_space<vmem>>, vector<1x256xbf16>
    %c1 = arith.constant 1 : index
    %c0_1 = arith.constant 0 : index
    %1 = vector.load %arg8[%c1, %c0_1] : memref<2x256xbf16, #tpu.memory_space<vmem>>, vector<1x256xbf16>
    %cst = arith.constant 0.000000e+00 : bf16
    %2 = vector.broadcast %cst : bf16 to vector<4x17xbf16>
    %c0_2 = arith.constant 0 : index
    %c0_3 = arith.constant 0 : index
    %3 = vector.load %arg10[%c0_2, %c0_3] : memref<4x290xbf16, #tpu.memory_space<vmem>>, vector<4x17xbf16>
    tpu.vector_store %arg10[%c0_2, %c0_3], %2 {strides = array<i32>} : memref<4x290xbf16, #tpu.memory_space<vmem>>, vector<4x17xbf16>,
    %c0_4 = arith.constant 0 : index
    %c273 = arith.constant 273 : index
    %4 = vector.load %arg10[%c0_4, %c273] : memref<4x290xbf16, #tpu.memory_space<vmem>>, vector<4x17xbf16>
    tpu.vector_store %arg10[%c0_4, %c273], %2 {strides = array<i32>} : memref<4x290xbf16, #tpu.memory_space<vmem>>, vector<4x17xbf16>,
    %c0_5 = arith.constant 0 : index
    %c0_6 = arith.constant 0 : index
    %c0_7 = arith.constant 0 : index
    %5 = vector.load %arg1[%c0_5, %c0_6, %c0_7] : memref<1x4x256xbf16, #tpu.memory_space<vmem>>, vector<1x4x256xbf16>
    %6 = vector.shape_cast %5 : vector<1x4x256xbf16> to vector<4x256xbf16>
    %c0_8 = arith.constant 0 : index
    %c17 = arith.constant 17 : index
    %7 = vector.load %arg10[%c0_8, %c17] : memref<4x290xbf16, #tpu.memory_space<vmem>>, vector<4x256xbf16>
    tpu.vector_store %arg10[%c0_8, %c17], %6 {strides = array<i32>} : memref<4x290xbf16, #tpu.memory_space<vmem>>, vector<4x256xbf16>,
    %c0_9 = arith.constant 0 : index
    %c0_10 = arith.constant 0 : index
    %8 = vector.load %arg10[%c0_9, %c0_10] : memref<4x290xbf16, #tpu.memory_space<vmem>>, vector<4x256xbf16>
    %9 = vector.broadcast %0 : vector<1x256xbf16> to vector<4x256xbf16>
    %10 = arith.mulf %8, %9 : vector<4x256xbf16>
    %c0_11 = arith.constant 0 : index
    %c0_12 = arith.constant 0 : index
    %11 = vector.load %arg11[%c0_11, %c0_12] : memref<36x256xbf16, #tpu.memory_space<vmem>>, vector<4x256xbf16>
    tpu.vector_store %arg11[%c0_11, %c0_12], %10 {strides = array<i32>} : memref<36x256xbf16, #tpu.memory_space<vmem>>, vector<4x256xbf16>,
    %c0_13 = arith.constant 0 : index
    %c1_14 = arith.constant 1 : index
    %12 = vector.load %arg10[%c0_13, %c1_14] : memref<4x290xbf16, #tpu.memory_space<vmem>>, vector<4x256xbf16>
    %c4 = arith.constant 4 : index
    %c0_15 = arith.constant 0 : index
    %13 = vector.load %arg11[%c4, %c0_15] : memref<36x256xbf16, #tpu.memory_space<vmem>>, vector<4x256xbf16>
    tpu.vector_store %arg11[%c4, %c0_15], %12 {strides = array<i32>} : memref<36x256xbf16, #tpu.memory_space<vmem>>, vector<4x256xbf16>,
    %c0_16 = arith.constant 0 : index
    %c2 = arith.constant 2 : index
    %14 = vector.load %arg10[%c0_16, %c2] : memref<4x290xbf16, #tpu.memory_space<vmem>>, vector<4x256xbf16>
    %15 = vector.broadcast %1 : vector<1x256xbf16> to vector<4x256xbf16>
    %16 = arith.mulf %14, %15 : vector<4x256xbf16>
    %c8 = arith.constant 8 : index
    %c0_17 = arith.constant 0 : index
    %17 = vector.load %arg11[%c8, %c0_17] : memref<36x256xbf16, #tpu.memory_space<vmem>>, vector<4x256xbf16>
    tpu.vector_store %arg11[%c8, %c0_17], %16 {strides = array<i32>} : memref<36x256xbf16, #tpu.memory_space<vmem>>, vector<4x256xbf16>,
    %c0_18 = arith.constant 0 : index
    %c16 = arith.constant 16 : index
    %18 = vector.load %arg10[%c0_18, %c16] : memref<4x290xbf16, #tpu.memory_space<vmem>>, vector<4x256xbf16>
    %19 = vector.broadcast %0 : vector<1x256xbf16> to vector<4x256xbf16>
    %20 = arith.mulf %18, %19 : vector<4x256xbf16>
    %c12 = arith.constant 12 : index
    %c0_19 = arith.constant 0 : index
    %21 = vector.load %arg11[%c12, %c0_19] : memref<36x256xbf16, #tpu.memory_space<vmem>>, vector<4x256xbf16>
    tpu.vector_store %arg11[%c12, %c0_19], %20 {strides = array<i32>} : memref<36x256xbf16, #tpu.memory_space<vmem>>, vector<4x256xbf16>,
    %c0_20 = arith.constant 0 : index
    %c17_21 = arith.constant 17 : index
    %22 = vector.load %arg10[%c0_20, %c17_21] : memref<4x290xbf16, #tpu.memory_space<vmem>>, vector<4x256xbf16>
    %c16_22 = arith.constant 16 : index
    %c0_23 = arith.constant 0 : index
    %23 = vector.load %arg11[%c16_22, %c0_23] : memref<36x256xbf16, #tpu.memory_space<vmem>>, vector<4x256xbf16>
    tpu.vector_store %arg11[%c16_22, %c0_23], %22 {strides = array<i32>} : memref<36x256xbf16, #tpu.memory_space<vmem>>, vector<4x256xbf16>,
    %c0_24 = arith.constant 0 : index
    %c18 = arith.constant 18 : index
    %24 = vector.load %arg10[%c0_24, %c18] : memref<4x290xbf16, #tpu.memory_space<vmem>>, vector<4x256xbf16>
    %25 = vector.broadcast %1 : vector<1x256xbf16> to vector<4x256xbf16>
    %26 = arith.mulf %24, %25 : vector<4x256xbf16>
    %c20 = arith.constant 20 : index
    %c0_25 = arith.constant 0 : index
    %27 = vector.load %arg11[%c20, %c0_25] : memref<36x256xbf16, #tpu.memory_space<vmem>>, vector<4x256xbf16>
    tpu.vector_store %arg11[%c20, %c0_25], %26 {strides = array<i32>} : memref<36x256xbf16, #tpu.memory_space<vmem>>, vector<4x256xbf16>,
    %c0_26 = arith.constant 0 : index
    %c32 = arith.constant 32 : index
    %28 = vector.load %arg10[%c0_26, %c32] : memref<4x290xbf16, #tpu.memory_space<vmem>>, vector<4x256xbf16>
    %29 = vector.broadcast %0 : vector<1x256xbf16> to vector<4x256xbf16>
    %30 = arith.mulf %28, %29 : vector<4x256xbf16>
    %c24 = arith.constant 24 : index
    %c0_27 = arith.constant 0 : index
    %31 = vector.load %arg11[%c24, %c0_27] : memref<36x256xbf16, #tpu.memory_space<vmem>>, vector<4x256xbf16>
    tpu.vector_store %arg11[%c24, %c0_27], %30 {strides = array<i32>} : memref<36x256xbf16, #tpu.memory_space<vmem>>, vector<4x256xbf16>,
    %c0_28 = arith.constant 0 : index
    %c33 = arith.constant 33 : index
    %32 = vector.load %arg10[%c0_28, %c33] : memref<4x290xbf16, #tpu.memory_space<vmem>>, vector<4x256xbf16>
    %c28 = arith.constant 28 : index
    %c0_29 = arith.constant 0 : index
    %33 = vector.load %arg11[%c28, %c0_29] : memref<36x256xbf16, #tpu.memory_space<vmem>>, vector<4x256xbf16>
    tpu.vector_store %arg11[%c28, %c0_29], %32 {strides = array<i32>} : memref<36x256xbf16, #tpu.memory_space<vmem>>, vector<4x256xbf16>,
    %c0_30 = arith.constant 0 : index
    %c34 = arith.constant 34 : index
    %34 = vector.load %arg10[%c0_30, %c34] : memref<4x290xbf16, #tpu.memory_space<vmem>>, vector<4x256xbf16>
    %35 = vector.broadcast %1 : vector<1x256xbf16> to vector<4x256xbf16>
    %36 = arith.mulf %34, %35 : vector<4x256xbf16>
    %c32_31 = arith.constant 32 : index
    %c0_32 = arith.constant 0 : index
    %37 = vector.load %arg11[%c32_31, %c0_32] : memref<36x256xbf16, #tpu.memory_space<vmem>>, vector<4x256xbf16>
    tpu.vector_store %arg11[%c32_31, %c0_32], %36 {strides = array<i32>} : memref<36x256xbf16, #tpu.memory_space<vmem>>, vector<4x256xbf16>,
    %c0_33 = arith.constant 0 : index
    %c0_34 = arith.constant 0 : index
    %38 = vector.load %arg2[%c0_33, %c0_34] : memref<32x36xbf16, #tpu.memory_space<vmem>>, vector<32x36xbf16>
    %c0_35 = arith.constant 0 : index
    %c0_36 = arith.constant 0 : index
    %39 = vector.load %arg11[%c0_35, %c0_36] : memref<36x256xbf16, #tpu.memory_space<vmem>>, vector<36x256xbf16>
    %cst_37 = arith.constant dense<0.000000e+00> : vector<32x256xf32>
    %40 = tpu.matmul %38, %39, %cst_37 {dimension_numbers = #tpu.dot_dimension_numbers<[1], [0], [0], [1], [0, 0, 1, 1], [], []>} : vector<32x36xbf16>, vector<36x256xbf16>, vector<32x256xf32> -> vector<32x256xf32>
    %c0_38 = arith.constant 0 : index
    %c0_39 = arith.constant 0 : index
    %41 = vector.load %arg3[%c0_38, %c0_39] : memref<32x1xf32, #tpu.memory_space<vmem>>, vector<32x1xf32>
    %42 = vector.broadcast %41 : vector<32x1xf32> to vector<32x256xf32>
    %43 = arith.addf %40, %42 : vector<32x256xf32>
    %cst_40 = arith.constant 0.000000e+00 : f32
    %44 = vector.broadcast %cst_40 : f32 to vector<32x256xf32>
    %45 = arith.maximumf %43, %44 : vector<32x256xf32>
    %cst_41 = arith.constant 0.000000e+00 : bf16
    %46 = vector.broadcast %cst_41 : bf16 to vector<32x17xbf16>
    %c0_42 = arith.constant 0 : index
    %c0_43 = arith.constant 0 : index
    %47 = vector.load %arg12[%c0_42, %c0_43] : memref<32x290xbf16, #tpu.memory_space<vmem>>, vector<32x17xbf16>
    tpu.vector_store %arg12[%c0_42, %c0_43], %46 {strides = array<i32>} : memref<32x290xbf16, #tpu.memory_space<vmem>>, vector<32x17xbf16>,
    %c0_44 = arith.constant 0 : index
    %c273_45 = arith.constant 273 : index
    %48 = vector.load %arg12[%c0_44, %c273_45] : memref<32x290xbf16, #tpu.memory_space<vmem>>, vector<32x17xbf16>
    tpu.vector_store %arg12[%c0_44, %c273_45], %46 {strides = array<i32>} : memref<32x290xbf16, #tpu.memory_space<vmem>>, vector<32x17xbf16>,
    %49 = arith.truncf %45 : vector<32x256xf32> to vector<32x256xbf16>
    %c0_46 = arith.constant 0 : index
    %c17_47 = arith.constant 17 : index
    %50 = vector.load %arg12[%c0_46, %c17_47] : memref<32x290xbf16, #tpu.memory_space<vmem>>, vector<32x256xbf16>
    tpu.vector_store %arg12[%c0_46, %c17_47], %49 {strides = array<i32>} : memref<32x290xbf16, #tpu.memory_space<vmem>>, vector<32x256xbf16>,
    %c0_48 = arith.constant 0 : index
    %c0_49 = arith.constant 0 : index
    %51 = vector.load %arg12[%c0_48, %c0_49] : memref<32x290xbf16, #tpu.memory_space<vmem>>, vector<32x256xbf16>
    %52 = vector.broadcast %0 : vector<1x256xbf16> to vector<32x256xbf16>
    %53 = arith.mulf %51, %52 : vector<32x256xbf16>
    %c0_50 = arith.constant 0 : index
    %c0_51 = arith.constant 0 : index
    %54 = vector.load %arg13[%c0_50, %c0_51] : memref<288x256xbf16, #tpu.memory_space<vmem>>, vector<32x256xbf16>
    tpu.vector_store %arg13[%c0_50, %c0_51], %53 {strides = array<i32>} : memref<288x256xbf16, #tpu.memory_space<vmem>>, vector<32x256xbf16>,
    %c0_52 = arith.constant 0 : index
    %c1_53 = arith.constant 1 : index
    %55 = vector.load %arg12[%c0_52, %c1_53] : memref<32x290xbf16, #tpu.memory_space<vmem>>, vector<32x256xbf16>
    %c32_54 = arith.constant 32 : index
    %c0_55 = arith.constant 0 : index
    %56 = vector.load %arg13[%c32_54, %c0_55] : memref<288x256xbf16, #tpu.memory_space<vmem>>, vector<32x256xbf16>
    tpu.vector_store %arg13[%c32_54, %c0_55], %55 {strides = array<i32>} : memref<288x256xbf16, #tpu.memory_space<vmem>>, vector<32x256xbf16>,
    %c0_56 = arith.constant 0 : index
    %c2_57 = arith.constant 2 : index
    %57 = vector.load %arg12[%c0_56, %c2_57] : memref<32x290xbf16, #tpu.memory_space<vmem>>, vector<32x256xbf16>
    %58 = vector.broadcast %1 : vector<1x256xbf16> to vector<32x256xbf16>
    %59 = arith.mulf %57, %58 : vector<32x256xbf16>
    %c64 = arith.constant 64 : index
    %c0_58 = arith.constant 0 : index
    %60 = vector.load %arg13[%c64, %c0_58] : memref<288x256xbf16, #tpu.memory_space<vmem>>, vector<32x256xbf16>
    tpu.vector_store %arg13[%c64, %c0_58], %59 {strides = array<i32>} : memref<288x256xbf16, #tpu.memory_space<vmem>>, vector<32x256xbf16>,
    %c0_59 = arith.constant 0 : index
    %c16_60 = arith.constant 16 : index
    %61 = vector.load %arg12[%c0_59, %c16_60] : memref<32x290xbf16, #tpu.memory_space<vmem>>, vector<32x256xbf16>
    %62 = vector.broadcast %0 : vector<1x256xbf16> to vector<32x256xbf16>
    %63 = arith.mulf %61, %62 : vector<32x256xbf16>
    %c96 = arith.constant 96 : index
    %c0_61 = arith.constant 0 : index
    %64 = vector.load %arg13[%c96, %c0_61] : memref<288x256xbf16, #tpu.memory_space<vmem>>, vector<32x256xbf16>
    tpu.vector_store %arg13[%c96, %c0_61], %63 {strides = array<i32>} : memref<288x256xbf16, #tpu.memory_space<vmem>>, vector<32x256xbf16>,
    %c0_62 = arith.constant 0 : index
    %c17_63 = arith.constant 17 : index
    %65 = vector.load %arg12[%c0_62, %c17_63] : memref<32x290xbf16, #tpu.memory_space<vmem>>, vector<32x256xbf16>
    %c128 = arith.constant 128 : index
    %c0_64 = arith.constant 0 : index
    %66 = vector.load %arg13[%c128, %c0_64] : memref<288x256xbf16, #tpu.memory_space<vmem>>, vector<32x256xbf16>
    tpu.vector_store %arg13[%c128, %c0_64], %65 {strides = array<i32>} : memref<288x256xbf16, #tpu.memory_space<vmem>>, vector<32x256xbf16>,
    %c0_65 = arith.constant 0 : index
    %c18_66 = arith.constant 18 : index
    %67 = vector.load %arg12[%c0_65, %c18_66] : memref<32x290xbf16, #tpu.memory_space<vmem>>, vector<32x256xbf16>
    %68 = vector.broadcast %1 : vector<1x256xbf16> to vector<32x256xbf16>
    %69 = arith.mulf %67, %68 : vector<32x256xbf16>
    %c160 = arith.constant 160 : index
    %c0_67 = arith.constant 0 : index
    %70 = vector.load %arg13[%c160, %c0_67] : memref<288x256xbf16, #tpu.memory_space<vmem>>, vector<32x256xbf16>
    tpu.vector_store %arg13[%c160, %c0_67], %69 {strides = array<i32>} : memref<288x256xbf16, #tpu.memory_space<vmem>>, vector<32x256xbf16>,
    %c0_68 = arith.constant 0 : index
    %c32_69 = arith.constant 32 : index
    %71 = vector.load %arg12[%c0_68, %c32_69] : memref<32x290xbf16, #tpu.memory_space<vmem>>, vector<32x256xbf16>
    %72 = vector.broadcast %0 : vector<1x256xbf16> to vector<32x256xbf16>
    %73 = arith.mulf %71, %72 : vector<32x256xbf16>
    %c192 = arith.constant 192 : index
    %c0_70 = arith.constant 0 : index
    %74 = vector.load %arg13[%c192, %c0_70] : memref<288x256xbf16, #tpu.memory_space<vmem>>, vector<32x256xbf16>
    tpu.vector_store %arg13[%c192, %c0_70], %73 {strides = array<i32>} : memref<288x256xbf16, #tpu.memory_space<vmem>>, vector<32x256xbf16>,
    %c0_71 = arith.constant 0 : index
    %c33_72 = arith.constant 33 : index
    %75 = vector.load %arg12[%c0_71, %c33_72] : memref<32x290xbf16, #tpu.memory_space<vmem>>, vector<32x256xbf16>
    %c224 = arith.constant 224 : index
    %c0_73 = arith.constant 0 : index
    %76 = vector.load %arg13[%c224, %c0_73] : memref<288x256xbf16, #tpu.memory_space<vmem>>, vector<32x256xbf16>
    tpu.vector_store %arg13[%c224, %c0_73], %75 {strides = array<i32>} : memref<288x256xbf16, #tpu.memory_space<vmem>>, vector<32x256xbf16>,
    %c0_74 = arith.constant 0 : index
    %c34_75 = arith.constant 34 : index
    %77 = vector.load %arg12[%c0_74, %c34_75] : memref<32x290xbf16, #tpu.memory_space<vmem>>, vector<32x256xbf16>
    %78 = vector.broadcast %1 : vector<1x256xbf16> to vector<32x256xbf16>
    %79 = arith.mulf %77, %78 : vector<32x256xbf16>
    %c256 = arith.constant 256 : index
    %c0_76 = arith.constant 0 : index
    %80 = vector.load %arg13[%c256, %c0_76] : memref<288x256xbf16, #tpu.memory_space<vmem>>, vector<32x256xbf16>
    tpu.vector_store %arg13[%c256, %c0_76], %79 {strides = array<i32>} : memref<288x256xbf16, #tpu.memory_space<vmem>>, vector<32x256xbf16>,
    %c0_77 = arith.constant 0 : index
    %c0_78 = arith.constant 0 : index
    %81 = vector.load %arg4[%c0_77, %c0_78] : memref<32x288xbf16, #tpu.memory_space<vmem>>, vector<32x288xbf16>
    %c0_79 = arith.constant 0 : index
    %c0_80 = arith.constant 0 : index
    %82 = vector.load %arg13[%c0_79, %c0_80] : memref<288x256xbf16, #tpu.memory_space<vmem>>, vector<288x256xbf16>
    %cst_81 = arith.constant dense<0.000000e+00> : vector<32x256xf32>
    %83 = tpu.matmul %81, %82, %cst_81 {dimension_numbers = #tpu.dot_dimension_numbers<[1], [0], [0], [1], [0, 0, 1, 1], [], []>} : vector<32x288xbf16>, vector<288x256xbf16>, vector<32x256xf32> -> vector<32x256xf32>
    %c0_82 = arith.constant 0 : index
    %c0_83 = arith.constant 0 : index
    %84 = vector.load %arg5[%c0_82, %c0_83] : memref<32x1xf32, #tpu.memory_space<vmem>>, vector<32x1xf32>
    %85 = vector.broadcast %84 : vector<32x1xf32> to vector<32x256xf32>
    %86 = arith.addf %83, %85 : vector<32x256xf32>
    %cst_84 = arith.constant 0.000000e+00 : f32
    %87 = vector.broadcast %cst_84 : f32 to vector<32x256xf32>
    %88 = arith.maximumf %86, %87 : vector<32x256xf32>
    %c0_85 = arith.constant 0 : index
    %c0_86 = arith.constant 0 : index
    %89 = vector.load %arg6[%c0_85, %c0_86] : memref<3x32xbf16, #tpu.memory_space<vmem>>, vector<3x32xbf16>
    %90 = arith.truncf %88 : vector<32x256xf32> to vector<32x256xbf16>
    %cst_87 = arith.constant dense<0.000000e+00> : vector<3x256xf32>
    %91 = tpu.matmul %89, %90, %cst_87 {dimension_numbers = #tpu.dot_dimension_numbers<[1], [0], [0], [1], [0, 0, 1, 1], [], []>} : vector<3x32xbf16>, vector<32x256xbf16>, vector<3x256xf32> -> vector<3x256xf32>
    %c0_88 = arith.constant 0 : index
    %c0_89 = arith.constant 0 : index
    %92 = vector.load %arg7[%c0_88, %c0_89] : memref<3x1xf32, #tpu.memory_space<vmem>>, vector<3x1xf32>
    %93 = vector.broadcast %92 : vector<3x1xf32> to vector<3x256xf32>
    %94 = arith.addf %91, %93 : vector<3x256xf32>
    %c0_90 = arith.constant 0 : index
    %c0_91 = arith.constant 0 : index
    %c0_92 = arith.constant 0 : index
    %95 = vector.load %arg9[%c0_90, %c0_91, %c0_92] : memref<1x3x256xf32, #tpu.memory_space<vmem>>, vector<1x3x256xf32>
    %96 = vector.shape_cast %95 : vector<1x3x256xf32> to vector<3x256xf32>
    %97 = vector.shape_cast %94 : vector<3x256xf32> to vector<1x3x256xf32>
    tpu.vector_store %arg9[%c0_90, %c0_91, %c0_92], %97 {strides = array<i32>} : memref<1x3x256xf32, #tpu.memory_space<vmem>>, vector<1x3x256xf32>,
    return
  }
  func.func @transform_0(%arg0: i32) -> (i32, i32, i32) {
    %c0_i32 = arith.constant 0 : i32
    %c0_i32_0 = arith.constant 0 : i32
    %c0_i32_1 = arith.constant 0 : i32
    return %arg0, %c0_i32, %c0_i32_0 : i32, i32, i32
  }
  func.func @transform_1(%arg0: i32) -> (i32, i32) {
    %c0_i32 = arith.constant 0 : i32
    %c0_i32_0 = arith.constant 0 : i32
    %c0_i32_1 = arith.constant 0 : i32
    return %c0_i32, %c0_i32_0 : i32, i32
  }
  func.func @transform_2(%arg0: i32) -> (i32, i32) {
    %c0_i32 = arith.constant 0 : i32
    %c0_i32_0 = arith.constant 0 : i32
    %c0_i32_1 = arith.constant 0 : i32
    return %c0_i32, %c0_i32_0 : i32, i32
  }
  func.func @transform_3(%arg0: i32) -> (i32, i32) {
    %c0_i32 = arith.constant 0 : i32
    %c0_i32_0 = arith.constant 0 : i32
    %c0_i32_1 = arith.constant 0 : i32
    return %c0_i32, %c0_i32_0 : i32, i32
  }
  func.func @transform_4(%arg0: i32) -> (i32, i32) {
    %c0_i32 = arith.constant 0 : i32
    %c0_i32_0 = arith.constant 0 : i32
    %c0_i32_1 = arith.constant 0 : i32
    return %c0_i32, %c0_i32_0 : i32, i32
  }
  func.func @transform_5(%arg0: i32) -> (i32, i32) {
    %c0_i32 = arith.constant 0 : i32
    %c0_i32_0 = arith.constant 0 : i32
    %c0_i32_1 = arith.constant 0 : i32
    return %c0_i32, %c0_i32_0 : i32, i32
  }
  func.func @transform_6(%arg0: i32) -> (i32, i32) {
    %c0_i32 = arith.constant 0 : i32
    %c0_i32_0 = arith.constant 0 : i32
    %c0_i32_1 = arith.constant 0 : i32
    return %c0_i32, %c0_i32_0 : i32, i32
  }
  func.func @transform_7(%arg0: i32) -> (i32, i32) {
    %c0_i32 = arith.constant 0 : i32
    %c0_i32_0 = arith.constant 0 : i32
    %c0_i32_1 = arith.constant 0 : i32
    return %c0_i32, %c0_i32_0 : i32, i32
  }
  func.func @transform_8(%arg0: i32) -> (i32, i32, i32) {
    %c0_i32 = arith.constant 0 : i32
    %c0_i32_0 = arith.constant 0 : i32
    %c0_i32_1 = arith.constant 0 : i32
    return %arg0, %c0_i32, %c0_i32_0 : i32, i32, i32
  }
}

</mosaic_0001>

<llo_original>
// kernel: final_block.1
$region0: #{final_block.1}
  #allocation0 [shape = 'u32[]', space=smem, size = 0x4, offset = 0x4, fixed_abs, tag = 'smem constant byte address 0x4 - core index']
  #allocation1 [shape = 'u32[144,128]{1,0:T(1,128)}', space=vmem, size = 0x12000, scoped, tag = 'internal scratch']
  #allocation2 [shape = 'bf16[4,290]{1,0:T(4,128)(2,1)}', space=vmem, size = 0xc00, scoped, tag = 'scratch operand']
  #allocation3 [shape = 'bf16[36,256]{1,0:T(8,128)(2,1)}', space=vmem, size = 0x5000, scoped, tag = 'scratch operand']
  #allocation4 [shape = 'bf16[32,290]{1,0:T(16,128)(2,1)}', space=vmem, size = 0x6000, scoped, tag = 'scratch operand']
  #allocation5 [shape = 'bf16[288,256]{1,0:T(16,128)(2,1)}', space=vmem, size = 0x24000, scoped, tag = 'scratch operand']
  %s0 = inlined_call_operand.vmem [shape: bf16[2,4,256], index: 0, kind: input, shape index: {}]
  %s1 = inlined_call_operand.vmem [shape: bf16[32,36], index: 1, kind: input, shape index: {}]
  %s2 = inlined_call_operand.vmem [shape: f32[32,1], index: 2, kind: input, shape index: {}]
  %s3 = inlined_call_operand.vmem [shape: bf16[32,288], index: 3, kind: input, shape index: {}]
  %s4 = inlined_call_operand.vmem [shape: f32[32,1], index: 4, kind: input, shape index: {}]
  %s5 = inlined_call_operand.vmem [shape: bf16[3,32], index: 5, kind: input, shape index: {}]
  %s6 = inlined_call_operand.vmem [shape: f32[3,1], index: 6, kind: input, shape index: {}]
  %s7 = inlined_call_operand.vmem [shape: bf16[2,256], index: 7, kind: input, shape index: {}]
  %s8 = inlined_call_operand.vmem [shape: f32[2,3,256], index: 8, kind: output, shape index: {}]
  %s9 = sld [smem:[#allocation0]]
  $region65: #{final_block.1} parent=0
    _
  %s11 = ssub.s32 1, %s9
  %s12 = scalar_select 0, %s11, %s9
  loop: start=0, step=1, limit=4
  $region2: #{final_block.1} parent=0 // loop_pre_header
    _
  $region3: #{final_block.1} parent=0 // loop_header
    %s14 = sphi 0, %s18
    %p15 = scmp.ge.s32.totalorder %s14, 4
    %s24 = sphi 0, %s26
    %s27 = sphi 0, %s24
    %s28 = sphi 0, %s27
    %s44 = sphi 0, %s28
    %s48 = sphi 0, %s48
    %s50 = sphi 0, %s48
    %s51 = sphi 0, %s50
    %s65 = sphi 0, %s51
    %s69 = sphi 0, %s69
    %s71 = sphi 0, %s69
    %s72 = sphi 0, %s71
    %s86 = sphi 0, %s72
    %s90 = sphi 0, %s90
    %s92 = sphi 0, %s90
    %s93 = sphi 0, %s92
    %s107 = sphi 0, %s93
    %s111 = sphi 0, %s111
    %s113 = sphi 0, %s111
    %s114 = sphi 0, %s113
    %s128 = sphi 0, %s114
    %s132 = sphi 0, %s132
    %s134 = sphi 0, %s132
    %s135 = sphi 0, %s134
    %s149 = sphi 0, %s135
    %s153 = sphi 0, %s153
    %s155 = sphi 0, %s153
    %s156 = sphi 0, %s155
    %s170 = sphi 0, %s156
    %s174 = sphi 0, %s174
    %s176 = sphi 0, %s174
    %s177 = sphi 0, %s176
    %s191 = sphi 0, %s177
    %s197 = sphi 0, %s199
    %s200 = sphi 0, %s197
    %s201 = sphi 0, %s200
    %s217 = sphi 0, %s201
  $region4: #{final_block.1} parent=0 // loop_header_branch
    %17 = sbr.rel (%p15) target = $region8
  $region5: #{final_block.1} parent=0 // loop_body
    %s19 = ssub.s32 %s14, 1
    %s20 = ssub.s32 %s14, 2
    %s21 = sadd.s32 %s14, 1
    %s22 = ssub.s32 %s14, %s21
    %p23 = scmp.eq.s32.totalorder %s22, 0
    %s25 = sadd.s32 %s24, 1
    %s26 = scalar_select %p23, %s24, %s25
    %p29 = pneg %p23
    %p30 = scmp.eq.s32.totalorder %s14, 1
    %p31 = por %p29, %p30
    %p32 = scmp.ne.s32.totalorder %s24, %s27
    %p33 = scmp.eq.s32.totalorder %s14, 0
    %p34 = por %p32, %p33
    %p35 = scmp.ne.s32.totalorder %s24, %s27
    %p36 = scmp.eq.s32.totalorder %s19, 1
    %p37 = por %p35, %p36
    %p38 = scmp.ne.s32.totalorder %s27, %s28
    %p39 = scmp.eq.s32.totalorder %s19, 0
    %p40 = por %p38, %p39
    %p41 = scmp.ne.s32.totalorder %s27, %s28
    %p42 = scmp.eq.s32.totalorder %s20, 1
    %p43 = por %p41, %p42
    %p45 = scmp.ne.s32.totalorder %s28, %s44
    %p46 = scmp.eq.s32.totalorder %s20, 0
    %p47 = por %p45, %p46
    %s49 = sadd.s32 %s48, 1
    %p52 = scmp.eq.s32.totalorder %s14, 1
    %p53 = scmp.ne.s32.totalorder %s48, %s50
    %p54 = scmp.eq.s32.totalorder %s14, 0
    %p55 = por %p53, %p54
    %p56 = scmp.ne.s32.totalorder %s48, %s50
    %p57 = scmp.eq.s32.totalorder %s19, 1
    %p58 = por %p56, %p57
    %p59 = scmp.ne.s32.totalorder %s50, %s51
    %p60 = scmp.eq.s32.totalorder %s19, 0
    %p61 = por %p59, %p60
    %p62 = scmp.ne.s32.totalorder %s50, %s51
    %p63 = scmp.eq.s32.totalorder %s20, 1
    %p64 = por %p62, %p63
    %p66 = scmp.ne.s32.totalorder %s51, %s65
    %p67 = scmp.eq.s32.totalorder %s20, 0
    %p68 = por %p66, %p67
    %s70 = sadd.s32 %s69, 1
    %p73 = scmp.eq.s32.totalorder %s14, 1
    %p74 = scmp.ne.s32.totalorder %s69, %s71
    %p75 = scmp.eq.s32.totalorder %s14, 0
    %p76 = por %p74, %p75
    %p77 = scmp.ne.s32.totalorder %s69, %s71
    %p78 = scmp.eq.s32.totalorder %s19, 1
    %p79 = por %p77, %p78
    %p80 = scmp.ne.s32.totalorder %s71, %s72
    %p81 = scmp.eq.s32.totalorder %s19, 0
    %p82 = por %p80, %p81
    %p83 = scmp.ne.s32.totalorder %s71, %s72
    %p84 = scmp.eq.s32.totalorder %s20, 1
    %p85 = por %p83, %p84
    %p87 = scmp.ne.s32.totalorder %s72, %s86
    %p88 = scmp.eq.s32.totalorder %s20, 0
    %p89 = por %p87, %p88
    %s91 = sadd.s32 %s90, 1
    %p94 = scmp.eq.s32.totalorder %s14, 1
    %p95 = scmp.ne.s32.totalorder %s90, %s92
    %p96 = scmp.eq.s32.totalorder %s14, 0
    %p97 = por %p95, %p96
    %p98 = scmp.ne.s32.totalorder %s90, %s92
    %p99 = scmp.eq.s32.totalorder %s19, 1
    %p100 = por %p98, %p99
    %p101 = scmp.ne.s32.totalorder %s92, %s93
    %p102 = scmp.eq.s32.totalorder %s19, 0
    %p103 = por %p101, %p102
    %p104 = scmp.ne.s32.totalorder %s92, %s93
    %p105 = scmp.eq.s32.totalorder %s20, 1
    %p106 = por %p104, %p105
    %p108 = scmp.ne.s32.totalorder %s93, %s107
    %p109 = scmp.eq.s32.totalorder %s20, 0
    %p110 = por %p108, %p109
    %s112 = sadd.s32 %s111, 1
    %p115 = scmp.eq.s32.totalorder %s14, 1
    %p116 = scmp.ne.s32.totalorder %s111, %s113
    %p117 = scmp.eq.s32.totalorder %s14, 0
    %p118 = por %p116, %p117
    %p119 = scmp.ne.s32.totalorder %s111, %s113
    %p120 = scmp.eq.s32.totalorder %s19, 1
    %p121 = por %p119, %p120
    %p122 = scmp.ne.s32.totalorder %s113, %s114
    %p123 = scmp.eq.s32.totalorder %s19, 0
    %p124 = por %p122, %p123
    %p125 = scmp.ne.s32.totalorder %s113, %s114
    %p126 = scmp.eq.s32.totalorder %s20, 1
    %p127 = por %p125, %p126
    %p129 = scmp.ne.s32.totalorder %s114, %s128
    %p130 = scmp.eq.s32.totalorder %s20, 0
    %p131 = por %p129, %p130
    %s133 = sadd.s32 %s132, 1
    %p136 = scmp.eq.s32.totalorder %s14, 1
    %p137 = scmp.ne.s32.totalorder %s132, %s134
    %p138 = scmp.eq.s32.totalorder %s14, 0
    %p139 = por %p137, %p138
    %p140 = scmp.ne.s32.totalorder %s132, %s134
    %p141 = scmp.eq.s32.totalorder %s19, 1
    %p142 = por %p140, %p141
    %p143 = scmp.ne.s32.totalorder %s134, %s135
    %p144 = scmp.eq.s32.totalorder %s19, 0
    %p145 = por %p143, %p144
    %p146 = scmp.ne.s32.totalorder %s134, %s135
    %p147 = scmp.eq.s32.totalorder %s20, 1
    %p148 = por %p146, %p147
    %p150 = scmp.ne.s32.totalorder %s135, %s149
    %p151 = scmp.eq.s32.totalorder %s20, 0
    %p152 = por %p150, %p151
    %s154 = sadd.s32 %s153, 1
    %p157 = scmp.eq.s32.totalorder %s14, 1
    %p158 = scmp.ne.s32.totalorder %s153, %s155
    %p159 = scmp.eq.s32.totalorder %s14, 0
    %p160 = por %p158, %p159
    %p161 = scmp.ne.s32.totalorder %s153, %s155
    %p162 = scmp.eq.s32.totalorder %s19, 1
    %p163 = por %p161, %p162
    %p164 = scmp.ne.s32.totalorder %s155, %s156
    %p165 = scmp.eq.s32.totalorder %s19, 0
    %p166 = por %p164, %p165
    %p167 = scmp.ne.s32.totalorder %s155, %s156
    %p168 = scmp.eq.s32.totalorder %s20, 1
    %p169 = por %p167, %p168
    %p171 = scmp.ne.s32.totalorder %s156, %s170
    %p172 = scmp.eq.s32.totalorder %s20, 0
    %p173 = por %p171, %p172
    %s175 = sadd.s32 %s174, 1
    %p178 = scmp.eq.s32.totalorder %s14, 1
    %p179 = scmp.ne.s32.totalorder %s174, %s176
    %p180 = scmp.eq.s32.totalorder %s14, 0
    %p181 = por %p179, %p180
    %p182 = scmp.ne.s32.totalorder %s174, %s176
    %p183 = scmp.eq.s32.totalorder %s19, 1
    %p184 = por %p182, %p183
    %p185 = scmp.ne.s32.totalorder %s176, %s177
    %p186 = scmp.eq.s32.totalorder %s19, 0
    %p187 = por %p185, %p186
    %p188 = scmp.ne.s32.totalorder %s176, %s177
    %p189 = scmp.eq.s32.totalorder %s20, 1
    %p190 = por %p188, %p189
    %p192 = scmp.ne.s32.totalorder %s177, %s191
    %p193 = scmp.eq.s32.totalorder %s20, 0
    %p194 = por %p192, %p193
    %s195 = ssub.s32 %s14, %s21
    %p196 = scmp.eq.s32.totalorder %s195, 0
    %s198 = sadd.s32 %s197, 1
    %s199 = scalar_select %p196, %s197, %s198
    %p202 = pneg %p196
    %p203 = scmp.eq.s32.totalorder %s14, 1
    %p204 = por %p202, %p203
    %p205 = scmp.ne.s32.totalorder %s197, %s200
    %p206 = scmp.eq.s32.totalorder %s14, 0
    %p207 = por %p205, %p206
    %p208 = scmp.ne.s32.totalorder %s197, %s200
    %p209 = scmp.eq.s32.totalorder %s19, 1
    %p210 = por %p208, %p209
    %p211 = scmp.ne.s32.totalorder %s200, %s201
    %p212 = scmp.eq.s32.totalorder %s19, 0
    %p213 = por %p211, %p212
    %p214 = scmp.ne.s32.totalorder %s200, %s201
    %p215 = scmp.eq.s32.totalorder %s20, 1
    %p216 = por %p214, %p215
    %p218 = scmp.ne.s32.totalorder %s201, %s217
    %p219 = scmp.eq.s32.totalorder %s20, 0
    %p220 = por %p218, %p219
    %p221 = scmp.le.s32.totalorder 1, %s14
    %p222 = scmp.lt.s32.totalorder %s14, 3
    %p223 = pnand %p221, %p222
    %p224 = pneg %p223
    // Predicated region
    $region9: #{final_block.1} parent=5 // pred_check
      _
    $region10: #{final_block.1} parent=5 // pred_check_branch
      %226 = sbr.rel (%p223) target = $region12
    $region11: #{final_block.1} parent=5 // pred_region
      %s227 = ssub.s32 %s14, 1
      // Predicated region
      $region13: #{final_block.1} parent=11 // pred_check
        %p228 = pneg %p61
      $region14: #{final_block.1} parent=11 // pred_check_branch
        %230 = sbr.rel (%p228) target = $region16
      $region15: #{final_block.1} parent=11 // pred_region
        _
      $region16: #{final_block.1} parent=11 // pred_fallthru
        _
      // Predicated region
      $region17: #{final_block.1} parent=11 // pred_check
        %p231 = pneg %p82
      $region18: #{final_block.1} parent=11 // pred_check_branch
        %233 = sbr.rel (%p231) target = $region20
      $region19: #{final_block.1} parent=11 // pred_region
        _
      $region20: #{final_block.1} parent=11 // pred_fallthru
        _
      // Predicated region
      $region21: #{final_block.1} parent=11 // pred_check
        %p234 = pneg %p103
      $region22: #{final_block.1} parent=11 // pred_check_branch
        %236 = sbr.rel (%p234) target = $region24
      $region23: #{final_block.1} parent=11 // pred_region
        _
      $region24: #{final_block.1} parent=11 // pred_fallthru
        _
      // Predicated region
      $region25: #{final_block.1} parent=11 // pred_check
        %p237 = pneg %p124
      $region26: #{final_block.1} parent=11 // pred_check_branch
        %239 = sbr.rel (%p237) target = $region28
      $region27: #{final_block.1} parent=11 // pred_region
        _
      $region28: #{final_block.1} parent=11 // pred_fallthru
        _
      // Predicated region
      $region29: #{final_block.1} parent=11 // pred_check
        %p240 = pneg %p145
      $region30: #{final_block.1} parent=11 // pred_check_branch
        %242 = sbr.rel (%p240) target = $region32
      $region31: #{final_block.1} parent=11 // pred_region
        _
      $region32: #{final_block.1} parent=11 // pred_fallthru
        _
      // Predicated region
      $region33: #{final_block.1} parent=11 // pred_check
        %p243 = pneg %p166
      $region34: #{final_block.1} parent=11 // pred_check_branch
        %245 = sbr.rel (%p243) target = $region36
      $region35: #{final_block.1} parent=11 // pred_region
        _
      $region36: #{final_block.1} parent=11 // pred_fallthru
        _
      // Predicated region
      $region37: #{final_block.1} parent=11 // pred_check
        %p246 = pneg %p187
      $region38: #{final_block.1} parent=11 // pred_check_branch
        %248 = sbr.rel (%p246) target = $region40
      $region39: #{final_block.1} parent=11 // pred_region
        _
      $region40: #{final_block.1} parent=11 // pred_fallthru
        _
    $region12: #{final_block.1} parent=5 // pred_fallthru
      _
    %p249 = scmp.lt.s32.totalorder %s14, 2
    // Predicated region
    $region41: #{final_block.1} parent=5 // pred_check
      %p250 = pneg %p249
    $region42: #{final_block.1} parent=5 // pred_check_branch
      %252 = sbr.rel (%p250) target = $region44
    $region43: #{final_block.1} parent=5 // pred_region
      // Predicated region
      $region45: #{final_block.1} parent=43 // pred_check
        %p253 = pneg %p34
      $region46: #{final_block.1} parent=43 // pred_check_branch
        %255 = sbr.rel (%p253) target = $region48
      $region47: #{final_block.1} parent=43 // pred_region
        %p256 = scmp.lt.s32.totalorder %s14, 1
        %s257 = scalar_select %p256, %s14, 1
        %s258 = smul.addr %s257, 2
        %s259 = smul.addr %s258, 2
        %s260 = scalar_lea.vmem %s0, %s259
      $region48: #{final_block.1} parent=43 // pred_fallthru
        _
    $region44: #{final_block.1} parent=5 // pred_fallthru
      _
    %p261 = scmp.le.s32.totalorder 1, %s14
    %p262 = scmp.lt.s32.totalorder %s14, 3
    %p263 = pnand %p261, %p262
    %p264 = pneg %p263
    // Predicated region
    $region49: #{final_block.1} parent=5 // pred_check
      _
    $region50: #{final_block.1} parent=5 // pred_check_branch
      %266 = sbr.rel (%p263) target = $region52
    $region51: #{final_block.1} parent=5 // pred_region
      %s267 = ssub.s32 %s14, 1
      %p268 = scmp.lt.s32.totalorder %s19, 1
      %s269 = scalar_select %p268, %s19, 1
      %s270 = smul.addr %s269, 2
      %s271 = smul.addr %s270, 2
      %s272 = scalar_lea.vmem %s0, %s271
      %p273 = pneg %p40
      %p274 = pneg %p37
      %p275 = pneg %p61
      %p276 = pneg %p58
      %p277 = pneg %p82
      %p278 = pneg %p79
      %p279 = pneg %p103
      %p280 = pneg %p100
      %p281 = pneg %p124
      %p282 = pneg %p121
      %p283 = pneg %p145
      %p284 = pneg %p142
      %p285 = pneg %p166
      %p286 = pneg %p163
      %p287 = pneg %p187
      %p288 = pneg %p184
      %p289 = pneg %p213
      %p290 = pneg %p210
      %p291 = scmp.lt.s32.totalorder %s19, 1
      %s292 = scalar_select %p291, %s19, 1
      %s293 = smul.addr %s292, 2
      %s294 = smul.addr %s293, 4
      %s295 = scalar_lea.vmem %s8, %s294
      %p296 = scmp.lt.s32.totalorder %s19, 1
      %s297 = scalar_select %p296, %s19, 1
      %s298 = smul.addr %s297, 2
      %s299 = smul.addr %s298, 2
      %s300 = scalar_lea.vmem %s0, %s299
      %p301 = scmp.lt.s32.totalorder %s19, 1
      %s302 = scalar_select %p301, %s19, 1
      %s303 = smul.addr %s302, 2
      %s304 = smul.addr %s303, 4
      %s305 = scalar_lea.vmem %s8, %s304
      %v307 = vld [vmem:[%s7] sm:$0x3]
      %vm308 = vcmask 132096
      %309 = vst.msk [vmem:[#allocation2] sm:$0x3] %vm308, 0
      %vm310 = vcmask 271496
      %311 = vst.msk [vmem:[#allocation2 + $0x4] sm:$0x3] %vm310, 0
      %v312 = vld [vmem:[%s300] sm:$0xf]
      %314 = vrot.lane.b32.xlu0 %v312, 17
      %v315 = vpop.permute.xlu0 %314
      %v316 = vrot.slane %v315, 6
      %vm317 = vcmask 138240
      %v318 = vsel %vm317, %v316, %v315
      %vm320 = vcmask 1041544
      %vm321 = vcmask 1043458
      %vm322 = vmor %vm321, %vm320
      %vm323 = vcmask 136196
      %vm324 = vmor %vm323, %vm322
      %325 = vst.msk [vmem:[#allocation2] sm:$0x3f] %vm324, %v318
      %v326 = vld [vmem:[#allocation2] sm:$0xf]
      %v329 = vunpack.c.l.s4 1966171168
      %v330 = vunpack.c.0.s8 %v329
      %v331 = vlaneseq
      %v332 = vshrl.u32 %v331, 7
      %v333 = vsub.s32 %v330, %v332
      %v334 = vrot.slane %v307, %v333
      %v335 = vcombine.high %v334, %v334
      %v337 = vunpack.c.l.s4 1966171168
      %v338 = vunpack.c.0.s8 %v337
      %v339 = vlaneseq
      %v340 = vshrl.u32 %v339, 7
      %v341 = vsub.s32 %v338, %v340
      %v342 = vrot.slane %v334, %v341
      %v344 = vunpack.c.l.s4 1966171168
      %v345 = vunpack.c.0.s8 %v344
      %v346 = vlaneseq
      %v347 = vshrl.u32 %v346, 7
      %v348 = vsub.s32 %v345, %v347
      %v349 = vrot.slane %v335, %v348
      %v351 = vpack.i.b16 %v342, %v342
      %v353 = vlaneseq
      %v354 = vshrl.u32 %v353, 7
      %v355 = vsub.s32 0, %v354
      %v356 = vrot.slane %v351, %v355
      %v358 = vpack.i.b16 %v349, %v349
      %v360 = vlaneseq
      %v361 = vshrl.u32 %v360, 7
      %v362 = vsub.s32 0, %v361
      %v363 = vrot.slane %v358, %v362
      %v366 = vcombine.low %v356, %v363
      %v368 = vunpack.c.l.s4 1983009808
      %v369 = vunpack.c.0.s8 %v368
      %v370 = vlaneseq
      %v371 = vshrl.u32 %v370, 7
      %v372 = vsub.s32 %v369, %v371
      %v373 = vrot.slane %v366, %v372
      %v375 = vmul.bf16 %v326, %v373
      %v378 = vunpack.c.l.s4 1983009808
      %v379 = vunpack.c.0.s8 %v378
      %v380 = vlaneseq
      %v381 = vshrl.u32 %v380, 7
      %v382 = vsub.s32 %v379, %v381
      %v383 = vrot.slane %v375, %v382
      %385 = vst [vmem:[#allocation3] sm:$0x33] %v383
      %v386 = vld [vmem:[#allocation2] sm:$0x3f]
      %v388 = vcombine.low %v386, %v386
      %v390 = vunpack.c.l.s4 1983009808
      %v391 = vunpack.c.0.s8 %v390
      %v392 = vlaneseq
      %v393 = vshrl.u32 %v392, 7
      %v394 = vsub.s32 %v391, %v393
      %v395 = vrot.slane %v388, %v394
      %v397 = vunpack.c.l.s4 1983009808
      %v398 = vunpack.c.0.s8 %v397
      %v399 = vlaneseq
      %v400 = vshrl.u32 %v399, 7
      %v401 = vsub.s32 %v398, %v400
      %v402 = vrot.slane %v386, %v401
      %403 = vrot.lane.b32.xlu0 %v395, 127
      %v404 = vpop.permute.xlu0 %403
      %405 = vrot.lane.b32.xlu0 %v402, 127
      %v406 = vpop.permute.xlu0 %405
      %v407 = vrot.slane %v404, 4
      %v408 = vrot.slane %v406, 4
      %vm409 = vcmask 1043456
      %v410 = vsel %vm409, %v407, %v408
      %vm411 = vcmask 1039360
      %v412 = vsel %vm411, %v404, %v410
      %414 = vst [vmem:[#allocation3] sm:$0xcc] %v412
      %v415 = vld [vmem:[#allocation2] sm:$0x3f]
      %v416 = vshrl.u32 %v342, 16
      %v417 = vpack.i.b16 %v416, %v416
      %v419 = vlaneseq
      %v420 = vshrl.u32 %v419, 7
      %v421 = vsub.s32 0, %v420
      %v422 = vrot.slane %v417, %v421
      %v423 = vshrl.u32 %v349, 16
      %v424 = vpack.i.b16 %v423, %v423
      %v426 = vlaneseq
      %v427 = vshrl.u32 %v426, 7
      %v428 = vsub.s32 0, %v427
      %v429 = vrot.slane %v424, %v428
      %v432 = vcombine.low %v422, %v429
      %v434 = vunpack.c.l.s4 1983009808
      %v435 = vunpack.c.0.s8 %v434
      %v436 = vlaneseq
      %v437 = vshrl.u32 %v436, 7
      %v438 = vsub.s32 %v435, %v437
      %v439 = vrot.slane %v432, %v438
      %440 = vrot.lane.b32.xlu0 %v439, 2
      %v441 = vpop.permute.xlu0 %440
      %v442 = vrot.slane %v441, 6
      %vm443 = vcmask 15360
      %v444 = vsel %vm443, %v442, %v441
      %v446 = vmul.bf16 %v415, %v444
      %v448 = vcombine.high %v446, %v446
      %v450 = vunpack.c.l.s4 1983009808
      %v451 = vunpack.c.0.s8 %v450
      %v452 = vlaneseq
      %v453 = vshrl.u32 %v452, 7
      %v454 = vsub.s32 %v451, %v453
      %v455 = vrot.slane %v446, %v454
      %v457 = vunpack.c.l.s4 1983009808
      %v458 = vunpack.c.0.s8 %v457
      %v459 = vlaneseq
      %v460 = vshrl.u32 %v459, 7
      %v461 = vsub.s32 %v458, %v460
      %v462 = vrot.slane %v448, %v461
      %463 = vrot.lane.b32.xlu0 %v455, 126
      %v464 = vpop.permute.xlu0 %463
      %465 = vrot.lane.b32.xlu0 %v462, 126
      %v466 = vpop.permute.xlu0 %465
      %v467 = vrot.slane %v464, 4
      %v468 = vrot.slane %v466, 4
      %v469 = vsel %vm409, %v467, %v468
      %vm470 = vcmask 1031168
      %v471 = vsel %vm470, %v464, %v469
      %473 = vst [vmem:[#allocation3 + $0x8] sm:$0x33] %v471
      %v474 = vld [vmem:[#allocation2] sm:$0x3f]
      %475 = vrot.lane.b32.xlu0 %v373, 16
      %v476 = vpop.permute.xlu0 %475
      %v477 = vrot.slane %v476, 6
      %vm478 = vcmask 130048
      %v479 = vsel %vm478, %v477, %v476
      %v481 = vmul.bf16 %v474, %v479
      %v483 = vcombine.low %v481, %v481
      %v485 = vunpack.c.l.s4 1983009808
      %v486 = vunpack.c.0.s8 %v485
      %v487 = vlaneseq
      %v488 = vshrl.u32 %v487, 7
      %v489 = vsub.s32 %v486, %v488
      %v490 = vrot.slane %v483, %v489
      %v492 = vunpack.c.l.s4 1983009808
      %v493 = vunpack.c.0.s8 %v492
      %v494 = vlaneseq
      %v495 = vshrl.u32 %v494, 7
      %v496 = vsub.s32 %v493, %v495
      %v497 = vrot.slane %v481, %v496
      %498 = vrot.lane.b32.xlu0 %v490, 112
      %v499 = vpop.permute.xlu0 %498
      %500 = vrot.lane.b32.xlu0 %v497, 112
      %v501 = vpop.permute.xlu0 %500
      %v502 = vrot.slane %v499, 4
      %v503 = vrot.slane %v501, 4
      %v504 = vsel %vm409, %v502, %v503
      %vm505 = vcmask 916480
      %v506 = vsel %vm505, %v499, %v504
      %508 = vst [vmem:[#allocation3 + $0x8] sm:$0xcc] %v506
      %v509 = vld [vmem:[#allocation2] sm:$0x3f]
      %v511 = vcombine.high %v509, %v509
      %v513 = vunpack.c.l.s4 1983009808
      %v514 = vunpack.c.0.s8 %v513
      %v515 = vlaneseq
      %v516 = vshrl.u32 %v515, 7
      %v517 = vsub.s32 %v514, %v516
      %v518 = vrot.slane %v509, %v517
      %v520 = vunpack.c.l.s4 1983009808
      %v521 = vunpack.c.0.s8 %v520
      %v522 = vlaneseq
      %v523 = vshrl.u32 %v522, 7
      %v524 = vsub.s32 %v521, %v523
      %v525 = vrot.slane %v511, %v524
      %526 = vrot.lane.b32.xlu0 %v518, 111
      %v527 = vpop.permute.xlu0 %526
      %528 = vrot.lane.b32.xlu0 %v525, 111
      %v529 = vpop.permute.xlu0 %528
      %v530 = vrot.slane %v527, 4
      %v531 = vrot.slane %v529, 4
      %v532 = vsel %vm409, %v530, %v531
      %vm533 = vcmask 908288
      %v534 = vsel %vm533, %v527, %v532
      %536 = vst [vmem:[#allocation3 + $0x10] sm:$0x33] %v534
      %v537 = vld [vmem:[#allocation2] sm:$0x3f]
      %538 = vrot.lane.b32.xlu0 %v439, 18
      %v539 = vpop.permute.xlu0 %538
      %v540 = vrot.slane %v539, 6
      %vm541 = vcmask 146432
      %v542 = vsel %vm541, %v540, %v539
      %v544 = vmul.bf16 %v537, %v542
      %v546 = vcombine.low %v544, %v544
      %v548 = vunpack.c.l.s4 1983009808
      %v549 = vunpack.c.0.s8 %v548
      %v550 = vlaneseq
      %v551 = vshrl.u32 %v550, 7
      %v552 = vsub.s32 %v549, %v551
      %v553 = vrot.slane %v546, %v552
      %v555 = vunpack.c.l.s4 1983009808
      %v556 = vunpack.c.0.s8 %v555
      %v557 = vlaneseq
      %v558 = vshrl.u32 %v557, 7
      %v559 = vsub.s32 %v556, %v558
      %v560 = vrot.slane %v544, %v559
      %561 = vrot.lane.b32.xlu0 %v553, 110
      %v562 = vpop.permute.xlu0 %561
      %563 = vrot.lane.b32.xlu0 %v560, 110
      %v564 = vpop.permute.xlu0 %563
      %v565 = vrot.slane %v562, 4
      %v566 = vrot.slane %v564, 4
      %v567 = vsel %vm409, %v565, %v566
      %vm568 = vcmask 900096
      %v569 = vsel %vm568, %v562, %v567
      %571 = vst [vmem:[#allocation3 + $0x10] sm:$0xcc] %v569
      %v572 = vld [vmem:[#allocation2] sm:$0x3f]
      %573 = vrot.lane.b32.xlu0 %v373, 32
      %v574 = vpop.permute.xlu0 %573
      %v575 = vrot.slane %v574, 6
      %vm576 = vcmask 261120
      %v577 = vsel %vm576, %v575, %v574
      %v579 = vmul.bf16 %v572, %v577
      %v581 = vcombine.high %v579, %v579
      %v583 = vunpack.c.l.s4 1983009808
      %v584 = vunpack.c.0.s8 %v583
      %v585 = vlaneseq
      %v586 = vshrl.u32 %v585, 7
      %v587 = vsub.s32 %v584, %v586
      %v588 = vrot.slane %v579, %v587
      %v590 = vunpack.c.l.s4 1983009808
      %v591 = vunpack.c.0.s8 %v590
      %v592 = vlaneseq
      %v593 = vshrl.u32 %v592, 7
      %v594 = vsub.s32 %v591, %v593
      %v595 = vrot.slane %v581, %v594
      %596 = vrot.lane.b32.xlu0 %v588, 96
      %v597 = vpop.permute.xlu0 %596
      %598 = vrot.lane.b32.xlu0 %v595, 96
      %v599 = vpop.permute.xlu0 %598
      %v600 = vrot.slane %v597, 4
      %v601 = vrot.slane %v599, 4
      %v602 = vsel %vm409, %v600, %v601
      %vm603 = vcmask 785408
      %v604 = vsel %vm603, %v597, %v602
      %606 = vst [vmem:[#allocation3 + $0x18] sm:$0x33] %v604
      %v607 = vld [vmem:[#allocation2] sm:$0x3f]
      %v609 = vcombine.low %v607, %v607
      %v611 = vunpack.c.l.s4 1983009808
      %v612 = vunpack.c.0.s8 %v611
      %v613 = vlaneseq
      %v614 = vshrl.u32 %v613, 7
      %v615 = vsub.s32 %v612, %v614
      %v616 = vrot.slane %v609, %v615
      %v618 = vunpack.c.l.s4 1983009808
      %v619 = vunpack.c.0.s8 %v618
      %v620 = vlaneseq
      %v621 = vshrl.u32 %v620, 7
      %v622 = vsub.s32 %v619, %v621
      %v623 = vrot.slane %v607, %v622
      %624 = vrot.lane.b32.xlu0 %v616, 95
      %v625 = vpop.permute.xlu0 %624
      %626 = vrot.lane.b32.xlu0 %v623, 95
      %v627 = vpop.permute.xlu0 %626
      %v628 = vrot.slane %v625, 4
      %v629 = vrot.slane %v627, 4
      %v630 = vsel %vm409, %v628, %v629
      %vm631 = vcmask 777216
      %v632 = vsel %vm631, %v625, %v630
      %634 = vst [vmem:[#allocation3 + $0x18] sm:$0xcc] %v632
      %v635 = vld [vmem:[#allocation2] sm:$0x3f]
      %636 = vrot.lane.b32.xlu0 %v439, 34
      %v637 = vpop.permute.xlu0 %636
      %v638 = vrot.slane %v637, 6
      %vm639 = vcmask 277504
      %v640 = vsel %vm639, %v638, %v637
      %v642 = vmul.bf16 %v635, %v640
      %v644 = vcombine.high %v642, %v642
      %v646 = vunpack.c.l.s4 1983009808
      %v647 = vunpack.c.0.s8 %v646
      %v648 = vlaneseq
      %v649 = vshrl.u32 %v648, 7
      %v650 = vsub.s32 %v647, %v649
      %v651 = vrot.slane %v642, %v650
      %v653 = vunpack.c.l.s4 1983009808
      %v654 = vunpack.c.0.s8 %v653
      %v655 = vlaneseq
      %v656 = vshrl.u32 %v655, 7
      %v657 = vsub.s32 %v654, %v656
      %v658 = vrot.slane %v644, %v657
      %659 = vrot.lane.b32.xlu0 %v651, 94
      %v660 = vpop.permute.xlu0 %659
      %661 = vrot.lane.b32.xlu0 %v658, 94
      %v662 = vpop.permute.xlu0 %661
      %v663 = vrot.slane %v660, 4
      %v664 = vrot.slane %v662, 4
      %v665 = vsel %vm409, %v663, %v664
      %vm666 = vcmask 769024
      %v667 = vsel %vm666, %v660, %v665
      %669 = vst [vmem:[#allocation3 + $0x20] sm:$0x33] %v667
      %v670 = vld [vmem:[%s1] sm:$0xf]
      %v671 = vld [vmem:[%s1 + $0x4] sm:$0xf]
      %v672 = vld [vmem:[%s1 + $0x8] sm:$0xf]
      %v673 = vld [vmem:[%s1 + $0xc] sm:$0xf]
      %v674 = vld [vmem:[#allocation3] sm:$0xff]
      %v675 = vld [vmem:[#allocation3 + $0x8] sm:$0xff]
      %v676 = vld [vmem:[#allocation3 + $0x10] sm:$0xff]
      %v677 = vld [vmem:[#allocation3 + $0x18] sm:$0xff]
      %v678 = vld [vmem:[#allocation3 + $0x20] sm:$0x33]
      %v679 = vld [vmem:[%s2] sm:$0xff]
      %v680 = vld [vmem:[%s2 + $0x8] sm:$0xff]
      %v681 = vld [vmem:[%s2 + $0x10] sm:$0xff]
      %v682 = vld [vmem:[%s2 + $0x18] sm:$0xff]
      %684 = vset.pattern.permute.xlu0 0
      %685 = vperm.xlu0 %684, %v679
      %v686 = vpop.permute.xlu0 %685
      %689 = vset.pattern.permute.xlu0 0
      %690 = vperm.xlu0 %689, %v680
      %v691 = vpop.permute.xlu0 %690
      %694 = vset.pattern.permute.xlu0 0
      %695 = vperm.xlu0 %694, %v681
      %v696 = vpop.permute.xlu0 %695
      %699 = vset.pattern.permute.xlu0 0
      %700 = vperm.xlu0 %699, %v682
      %v701 = vpop.permute.xlu0 %700
      %v707 = vunpack.c.l.b16 %v670
      %v708 = vunpack.c.l.b16 %v671
      %v709 = vunpack.c.l.b16 %v672
      %v710 = vunpack.c.l.b16 %v673
      %v711 = vpack.c.b16 %v708, %v707
      %v712 = vpack.c.b16 %v710, %v709
      %v718 = vunpack.c.l.b16 %v674
      %v719 = vunpack.c.h.b16 %v674
      %v720 = vunpack.c.l.b16 %v675
      %v721 = vunpack.c.h.b16 %v675
      %v722 = vunpack.c.l.b16 %v676
      %v723 = vunpack.c.h.b16 %v676
      %v724 = vunpack.c.l.b16 %v677
      %v725 = vunpack.c.h.b16 %v677
      %v726 = vunpack.c.l.b16 %v678
      %v727 = vunpack.c.h.b16 %v678
      %v728 = vpack.c.b16 %v720, %v718
      %v729 = vpack.c.b16 %v721, %v719
      %v730 = vpack.c.b16 %v724, %v722
      %v731 = vpack.c.b16 %v725, %v723
      %v732 = vpack.c.b16 %v726, %v726
      %v733 = vpack.c.b16 %v727, %v727
      %vm738 = vcmask 293888
      %v740 = vsel %vm738, %v711, 0
      %v743 = vsel %vm738, %v712, 0
      %vm745 = vcmask 1041408
      %v747 = vsel %vm745, %v732, 0
      %v750 = vsel %vm745, %v733, 0
      %752 = vmatprep.subr.bf16.mxu0 %v729
      %753 = vmatpush1.bf16.msra.mxu0 %v728
      %754 = vmatprep.subr.bf16.mxu0 %v731
      %755 = vmatpush1.bf16.msra.mxu0 %v730
      %756 = vmatprep.subr.bf16.mxu0 %v750
      %757 = vmatpush1.bf16.msra.mxu0 %v747
      %758 = vmatprep.subr.bf16.mxu0 0
      %759 = vmatpush1.bf16.msra.mxu0 0
      %760 = vmatprep.subr.bf16.mxu0 0
      %761 = vmatpush1.bf16.msra.mxu0 0
      %762 = vmatprep.subr.bf16.mxu0 0
      %763 = vmatpush1.bf16.msra.mxu0 0
      %764 = vmatprep.subr.bf16.mxu0 0
      %765 = vmatpush1.bf16.msra.mxu0 0
      %766 = vmatprep.subr.bf16.mxu0 0
      %767 = vmatpush1.bf16.msra.mxu0 0
      %768 = vmatprep.subr.bf16.mxu0 0
      %769 = vmatpush1.bf16.msra.mxu0 0
      %770 = vmatprep.subr.bf16.mxu0 0
      %771 = vmatpush1.bf16.msra.mxu0 0
      %772 = vmatprep.subr.bf16.mxu0 0
      %773 = vmatpush1.bf16.msra.mxu0 0
      %774 = vmatprep.subr.bf16.mxu0 0
      %775 = vmatpush1.bf16.msra.mxu0 0
      %776 = vmatprep.subr.bf16.mxu0 0
      %777 = vmatpush1.bf16.msra.mxu0 0
      %778 = vmatprep.subr.bf16.mxu0 0
      %779 = vmatpush1.bf16.msra.mxu0 0
      %780 = vmatprep.subr.bf16.mxu0 0
      %781 = vmatpush1.bf16.msra.mxu0 0
      %782 = vmatprep.subr.bf16.mxu0 0
      %783 = vmatpush1.bf16.msra.mxu0 0
      %784 = vmatprep.mubr.bf16.mxu0 0
      %785 = vmatmul.mubr.bf16.gmra.mrb[0].mxu0 %v740
      %v786 = vpop.f32.mrb[0].mxu0
      %v787 = vadd.f32 %v686, %v786
      %v788 = vpop.f32.mrb[0].mxu0
      %v789 = vadd.f32 %v686, %v788
      %v790 = vpop.f32.mrb[0].mxu0
      %v791 = vadd.f32 %v691, %v790
      %v792 = vpop.f32.mrb[0].mxu0
      %v793 = vadd.f32 %v691, %v792
      %794 = vmatprep.mubr.bf16.mxu0 0
      %795 = vmatmul.mubr.bf16.gmra.mrb[0].mxu0 %v743
      %v796 = vpop.f32.mrb[0].mxu0
      %v797 = vadd.f32 %v696, %v796
      %v798 = vpop.f32.mrb[0].mxu0
      %v799 = vadd.f32 %v696, %v798
      %v800 = vpop.f32.mrb[0].mxu0
      %v801 = vadd.f32 %v701, %v800
      %v802 = vpop.f32.mrb[0].mxu0
      %v803 = vadd.f32 %v701, %v802
      %804 = vdwg.mxu0
      %v805 = vmax.f32 %v787, 0.0
      %v806 = vmax.f32 %v789, 0.0
      %v807 = vmax.f32 %v791, 0.0
      %v808 = vmax.f32 %v793, 0.0
      %v809 = vmax.f32 %v797, 0.0
      %v810 = vmax.f32 %v799, 0.0
      %v811 = vmax.f32 %v801, 0.0
      %v812 = vmax.f32 %v803, 0.0
      %vm813 = vcmask 138240
      %814 = vst.msk [vmem:[#allocation4] sm:$0xff] %vm813, 0
      %815 = vst.msk [vmem:[#allocation4 + $0x18] sm:$0xff] %vm813, 0
      %vm816 = vcmask 277640
      %817 = vst.msk [vmem:[#allocation4 + $0x10] sm:$0xff] %vm816, 0
      %818 = vst.msk [vmem:[#allocation4 + $0x28] sm:$0xff] %vm816, 0
      %v819 = vpack.c.bf16 %v807, %v805
      %v820 = vpack.c.bf16 %v808, %v806
      %v821 = vpack.c.bf16 %v811, %v809
      %v822 = vpack.c.bf16 %v812, %v810
      %827 = vrot.lane.b32.xlu0 %v819, 17
      %v828 = vpop.permute.xlu0 %827
      %829 = vrot.lane.b32.xlu0 %v820, 17
      %v830 = vpop.permute.xlu0 %829
      %831 = vrot.lane.b32.xlu0 %v821, 17
      %v832 = vpop.permute.xlu0 %831
      %833 = vrot.lane.b32.xlu0 %v822, 17
      %v834 = vpop.permute.xlu0 %833
      %v835 = vsel %vm317, %v828, %v830
      %v836 = vsel %vm317, %v832, %v834
      %vm843 = vcmask 1047688
      %844 = vst.msk [vmem:[#allocation4] sm:$0xff] %vm843, %v828
      %845 = vst [vmem:[#allocation4 + $0x8] sm:$0xff] %v835
      %846 = vst.msk [vmem:[#allocation4 + $0x10] sm:$0xff] %vm813, %v830
      %847 = vst.msk [vmem:[#allocation4 + $0x18] sm:$0xff] %vm843, %v832
      %848 = vst [vmem:[#allocation4 + $0x20] sm:$0xff] %v836
      %849 = vst.msk [vmem:[#allocation4 + $0x28] sm:$0xff] %vm813, %v834
      %v850 = vld [vmem:[#allocation4] sm:$0xff]
      %v851 = vld [vmem:[#allocation4 + $0x8] sm:$0xff]
      %v852 = vld [vmem:[#allocation4 + $0x18] sm:$0xff]
      %v853 = vld [vmem:[#allocation4 + $0x20] sm:$0xff]
      %v854 = vmul.bf16 %v850, %v356
      %v855 = vmul.bf16 %v851, %v363
      %v856 = vmul.bf16 %v852, %v356
      %v857 = vmul.bf16 %v853, %v363
      %858 = vst [vmem:[#allocation5] sm:$0xff] %v854
      %859 = vst [vmem:[#allocation5 + $0x8] sm:$0xff] %v855
      %860 = vst [vmem:[#allocation5 + $0x10] sm:$0xff] %v856
      %861 = vst [vmem:[#allocation5 + $0x18] sm:$0xff] %v857
      %v862 = vld [vmem:[#allocation4] sm:$0xff]
      %v863 = vld [vmem:[#allocation4 + $0x8] sm:$0xff]
      %v864 = vld [vmem:[#allocation4 + $0x10] sm:$0xff]
      %v865 = vld [vmem:[#allocation4 + $0x18] sm:$0xff]
      %v866 = vld [vmem:[#allocation4 + $0x20] sm:$0xff]
      %v867 = vld [vmem:[#allocation4 + $0x28] sm:$0xff]
      %874 = vrot.lane.b32.xlu0 %v862, 127
      %v875 = vpop.permute.xlu0 %874
      %876 = vrot.lane.b32.xlu0 %v863, 127
      %v877 = vpop.permute.xlu0 %876
      %878 = vrot.lane.b32.xlu0 %v864, 127
      %v879 = vpop.permute.xlu0 %878
      %880 = vrot.lane.b32.xlu0 %v865, 127
      %v881 = vpop.permute.xlu0 %880
      %882 = vrot.lane.b32.xlu0 %v866, 127
      %v883 = vpop.permute.xlu0 %882
      %884 = vrot.lane.b32.xlu0 %v867, 127
      %v885 = vpop.permute.xlu0 %884
      %v886 = vsel %vm411, %v875, %v877
      %v887 = vsel %vm411, %v877, %v879
      %v888 = vsel %vm411, %v881, %v883
      %v889 = vsel %vm411, %v883, %v885
      %894 = vst [vmem:[#allocation5 + $0x20] sm:$0xff] %v886
      %895 = vst [vmem:[#allocation5 + $0x28] sm:$0xff] %v887
      %896 = vst [vmem:[#allocation5 + $0x30] sm:$0xff] %v888
      %897 = vst [vmem:[#allocation5 + $0x38] sm:$0xff] %v889
      %v898 = vld [vmem:[#allocation4] sm:$0xff]
      %v899 = vld [vmem:[#allocation4 + $0x8] sm:$0xff]
      %v900 = vld [vmem:[#allocation4 + $0x10] sm:$0xff]
      %v901 = vld [vmem:[#allocation4 + $0x18] sm:$0xff]
      %v902 = vld [vmem:[#allocation4 + $0x20] sm:$0xff]
      %v903 = vld [vmem:[#allocation4 + $0x28] sm:$0xff]
      %904 = vrot.lane.b32.xlu0 %v422, 2
      %v905 = vpop.permute.xlu0 %904
      %906 = vrot.lane.b32.xlu0 %v429, 2
      %v907 = vpop.permute.xlu0 %906
      %v908 = vsel %vm443, %v905, %v907
      %v912 = vmul.bf16 %v898, %v905
      %v913 = vmul.bf16 %v899, %v908
      %v914 = vmul.bf16 %v900, %v907
      %v915 = vmul.bf16 %v901, %v905
      %v916 = vmul.bf16 %v902, %v908
      %v917 = vmul.bf16 %v903, %v907
      %924 = vrot.lane.b32.xlu0 %v912, 126
      %v925 = vpop.permute.xlu0 %924
      %926 = vrot.lane.b32.xlu0 %v913, 126
      %v927 = vpop.permute.xlu0 %926
      %928 = vrot.lane.b32.xlu0 %v914, 126
      %v929 = vpop.permute.xlu0 %928
      %930 = vrot.lane.b32.xlu0 %v915, 126
      %v931 = vpop.permute.xlu0 %930
      %932 = vrot.lane.b32.xlu0 %v916, 126
      %v933 = vpop.permute.xlu0 %932
      %934 = vrot.lane.b32.xlu0 %v917, 126
      %v935 = vpop.permute.xlu0 %934
      %v936 = vsel %vm470, %v925, %v927
      %v937 = vsel %vm470, %v927, %v929
      %v938 = vsel %vm470, %v931, %v933
      %v939 = vsel %vm470, %v933, %v935
      %944 = vst [vmem:[#allocation5 + $0x40] sm:$0xff] %v936
      %945 = vst [vmem:[#allocation5 + $0x48] sm:$0xff] %v937
      %946 = vst [vmem:[#allocation5 + $0x50] sm:$0xff] %v938
      %947 = vst [vmem:[#allocation5 + $0x58] sm:$0xff] %v939
      %v948 = vld [vmem:[#allocation4] sm:$0xff]
      %v949 = vld [vmem:[#allocation4 + $0x8] sm:$0xff]
      %v950 = vld [vmem:[#allocation4 + $0x10] sm:$0xff]
      %v951 = vld [vmem:[#allocation4 + $0x18] sm:$0xff]
      %v952 = vld [vmem:[#allocation4 + $0x20] sm:$0xff]
      %v953 = vld [vmem:[#allocation4 + $0x28] sm:$0xff]
      %954 = vrot.lane.b32.xlu0 %v356, 16
      %v955 = vpop.permute.xlu0 %954
      %956 = vrot.lane.b32.xlu0 %v363, 16
      %v957 = vpop.permute.xlu0 %956
      %v958 = vsel %vm478, %v955, %v957
      %v962 = vmul.bf16 %v948, %v955
      %v963 = vmul.bf16 %v949, %v958
      %v964 = vmul.bf16 %v950, %v957
      %v965 = vmul.bf16 %v951, %v955
      %v966 = vmul.bf16 %v952, %v958
      %v967 = vmul.bf16 %v953, %v957
      %974 = vrot.lane.b32.xlu0 %v962, 112
      %v975 = vpop.permute.xlu0 %974
      %976 = vrot.lane.b32.xlu0 %v963, 112
      %v977 = vpop.permute.xlu0 %976
      %978 = vrot.lane.b32.xlu0 %v964, 112
      %v979 = vpop.permute.xlu0 %978
      %980 = vrot.lane.b32.xlu0 %v965, 112
      %v981 = vpop.permute.xlu0 %980
      %982 = vrot.lane.b32.xlu0 %v966, 112
      %v983 = vpop.permute.xlu0 %982
      %984 = vrot.lane.b32.xlu0 %v967, 112
      %v985 = vpop.permute.xlu0 %984
      %v986 = vsel %vm505, %v975, %v977
      %v987 = vsel %vm505, %v977, %v979
      %v988 = vsel %vm505, %v981, %v983
      %v989 = vsel %vm505, %v983, %v985
      %994 = vst [vmem:[#allocation5 + $0x60] sm:$0xff] %v986
      %995 = vst [vmem:[#allocation5 + $0x68] sm:$0xff] %v987
      %996 = vst [vmem:[#allocation5 + $0x70] sm:$0xff] %v988
      %997 = vst [vmem:[#allocation5 + $0x78] sm:$0xff] %v989
      %v998 = vld [vmem:[#allocation4] sm:$0xff]
      %v999 = vld [vmem:[#allocation4 + $0x8] sm:$0xff]
      %v1000 = vld [vmem:[#allocation4 + $0x10] sm:$0xff]
      %v1001 = vld [vmem:[#allocation4 + $0x18] sm:$0xff]
      %v1002 = vld [vmem:[#allocation4 + $0x20] sm:$0xff]
      %v1003 = vld [vmem:[#allocation4 + $0x28] sm:$0xff]
      %1010 = vrot.lane.b32.xlu0 %v998, 111
      %v1011 = vpop.permute.xlu0 %1010
      %1012 = vrot.lane.b32.xlu0 %v999, 111
      %v1013 = vpop.permute.xlu0 %1012
      %1014 = vrot.lane.b32.xlu0 %v1000, 111
      %v1015 = vpop.permute.xlu0 %1014
      %1016 = vrot.lane.b32.xlu0 %v1001, 111
      %v1017 = vpop.permute.xlu0 %1016
      %1018 = vrot.lane.b32.xlu0 %v1002, 111
      %v1019 = vpop.permute.xlu0 %1018
      %1020 = vrot.lane.b32.xlu0 %v1003, 111
      %v1021 = vpop.permute.xlu0 %1020
      %v1022 = vsel %vm533, %v1011, %v1013
      %v1023 = vsel %vm533, %v1013, %v1015
      %v1024 = vsel %vm533, %v1017, %v1019
      %v1025 = vsel %vm533, %v1019, %v1021
      %1030 = vst [vmem:[#allocation5 + $0x80] sm:$0xff] %v1022
      %1031 = vst [vmem:[#allocation5 + $0x88] sm:$0xff] %v1023
      %1032 = vst [vmem:[#allocation5 + $0x90] sm:$0xff] %v1024
      %1033 = vst [vmem:[#allocation5 + $0x98] sm:$0xff] %v1025
      %v1034 = vld [vmem:[#allocation4] sm:$0xff]
      %v1035 = vld [vmem:[#allocation4 + $0x8] sm:$0xff]
      %v1036 = vld [vmem:[#allocation4 + $0x10] sm:$0xff]
      %v1037 = vld [vmem:[#allocation4 + $0x18] sm:$0xff]
      %v1038 = vld [vmem:[#allocation4 + $0x20] sm:$0xff]
      %v1039 = vld [vmem:[#allocation4 + $0x28] sm:$0xff]
      %1040 = vrot.lane.b32.xlu0 %v422, 18
      %v1041 = vpop.permute.xlu0 %1040
      %1042 = vrot.lane.b32.xlu0 %v429, 18
      %v1043 = vpop.permute.xlu0 %1042
      %v1044 = vsel %vm541, %v1041, %v1043
      %v1048 = vmul.bf16 %v1034, %v1041
      %v1049 = vmul.bf16 %v1035, %v1044
      %v1050 = vmul.bf16 %v1036, %v1043
      %v1051 = vmul.bf16 %v1037, %v1041
      %v1052 = vmul.bf16 %v1038, %v1044
      %v1053 = vmul.bf16 %v1039, %v1043
      %1060 = vrot.lane.b32.xlu0 %v1048, 110
      %v1061 = vpop.permute.xlu0 %1060
      %1062 = vrot.lane.b32.xlu0 %v1049, 110
      %v1063 = vpop.permute.xlu0 %1062
      %1064 = vrot.lane.b32.xlu0 %v1050, 110
      %v1065 = vpop.permute.xlu0 %1064
      %1066 = vrot.lane.b32.xlu0 %v1051, 110
      %v1067 = vpop.permute.xlu0 %1066
      %1068 = vrot.lane.b32.xlu0 %v1052, 110
      %v1069 = vpop.permute.xlu0 %1068
      %1070 = vrot.lane.b32.xlu0 %v1053, 110
      %v1071 = vpop.permute.xlu0 %1070
      %v1072 = vsel %vm568, %v1061, %v1063
      %v1073 = vsel %vm568, %v1063, %v1065
      %v1074 = vsel %vm568, %v1067, %v1069
      %v1075 = vsel %vm568, %v1069, %v1071
      %1080 = vst [vmem:[#allocation5 + $0xa0] sm:$0xff] %v1072
      %1081 = vst [vmem:[#allocation5 + $0xa8] sm:$0xff] %v1073
      %1082 = vst [vmem:[#allocation5 + $0xb0] sm:$0xff] %v1074
      %1083 = vst [vmem:[#allocation5 + $0xb8] sm:$0xff] %v1075
      %v1084 = vld [vmem:[#allocation4] sm:$0xff]
      %v1085 = vld [vmem:[#allocation4 + $0x8] sm:$0xff]
      %v1086 = vld [vmem:[#allocation4 + $0x10] sm:$0xff]
      %v1087 = vld [vmem:[#allocation4 + $0x18] sm:$0xff]
      %v1088 = vld [vmem:[#allocation4 + $0x20] sm:$0xff]
      %v1089 = vld [vmem:[#allocation4 + $0x28] sm:$0xff]
      %1090 = vrot.lane.b32.xlu0 %v356, 32
      %v1091 = vpop.permute.xlu0 %1090
      %1092 = vrot.lane.b32.xlu0 %v363, 32
      %v1093 = vpop.permute.xlu0 %1092
      %v1094 = vsel %vm576, %v1091, %v1093
      %v1098 = vmul.bf16 %v1084, %v1091
      %v1099 = vmul.bf16 %v1085, %v1094
      %v1100 = vmul.bf16 %v1086, %v1093
      %v1101 = vmul.bf16 %v1087, %v1091
      %v1102 = vmul.bf16 %v1088, %v1094
      %v1103 = vmul.bf16 %v1089, %v1093
      %1110 = vrot.lane.b32.xlu0 %v1098, 96
      %v1111 = vpop.permute.xlu0 %1110
      %1112 = vrot.lane.b32.xlu0 %v1099, 96
      %v1113 = vpop.permute.xlu0 %1112
      %1114 = vrot.lane.b32.xlu0 %v1100, 96
      %v1115 = vpop.permute.xlu0 %1114
      %1116 = vrot.lane.b32.xlu0 %v1101, 96
      %v1117 = vpop.permute.xlu0 %1116
      %1118 = vrot.lane.b32.xlu0 %v1102, 96
      %v1119 = vpop.permute.xlu0 %1118
      %1120 = vrot.lane.b32.xlu0 %v1103, 96
      %v1121 = vpop.permute.xlu0 %1120
      %v1122 = vsel %vm603, %v1111, %v1113
      %v1123 = vsel %vm603, %v1113, %v1115
      %v1124 = vsel %vm603, %v1117, %v1119
      %v1125 = vsel %vm603, %v1119, %v1121
      %1130 = vst [vmem:[#allocation5 + $0xc0] sm:$0xff] %v1122
      %1131 = vst [vmem:[#allocation5 + $0xc8] sm:$0xff] %v1123
      %1132 = vst [vmem:[#allocation5 + $0xd0] sm:$0xff] %v1124
      %1133 = vst [vmem:[#allocation5 + $0xd8] sm:$0xff] %v1125
      %v1134 = vld [vmem:[#allocation4] sm:$0xff]
      %v1135 = vld [vmem:[#allocation4 + $0x8] sm:$0xff]
      %v1136 = vld [vmem:[#allocation4 + $0x10] sm:$0xff]
      %v1137 = vld [vmem:[#allocation4 + $0x18] sm:$0xff]
      %v1138 = vld [vmem:[#allocation4 + $0x20] sm:$0xff]
      %v1139 = vld [vmem:[#allocation4 + $0x28] sm:$0xff]
      %1146 = vrot.lane.b32.xlu0 %v1134, 95
      %v1147 = vpop.permute.xlu0 %1146
      %1148 = vrot.lane.b32.xlu0 %v1135, 95
      %v1149 = vpop.permute.xlu0 %1148
      %1150 = vrot.lane.b32.xlu0 %v1136, 95
      %v1151 = vpop.permute.xlu0 %1150
      %1152 = vrot.lane.b32.xlu0 %v1137, 95
      %v1153 = vpop.permute.xlu0 %1152
      %1154 = vrot.lane.b32.xlu0 %v1138, 95
      %v1155 = vpop.permute.xlu0 %1154
      %1156 = vrot.lane.b32.xlu0 %v1139, 95
      %v1157 = vpop.permute.xlu0 %1156
      %v1158 = vsel %vm631, %v1147, %v1149
      %v1159 = vsel %vm631, %v1149, %v1151
      %v1160 = vsel %vm631, %v1153, %v1155
      %v1161 = vsel %vm631, %v1155, %v1157
      %1166 = vst [vmem:[#allocation5 + $0xe0] sm:$0xff] %v1158
      %1167 = vst [vmem:[#allocation5 + $0xe8] sm:$0xff] %v1159
      %1168 = vst [vmem:[#allocation5 + $0xf0] sm:$0xff] %v1160
      %1169 = vst [vmem:[#allocation5 + $0xf8] sm:$0xff] %v1161
      %v1170 = vld [vmem:[#allocation4] sm:$0xff]
      %v1171 = vld [vmem:[#allocation4 + $0x8] sm:$0xff]
      %v1172 = vld [vmem:[#allocation4 + $0x10] sm:$0xff]
      %v1173 = vld [vmem:[#allocation4 + $0x18] sm:$0xff]
      %v1174 = vld [vmem:[#allocation4 + $0x20] sm:$0xff]
      %v1175 = vld [vmem:[#allocation4 + $0x28] sm:$0xff]
      %1176 = vrot.lane.b32.xlu0 %v422, 34
      %v1177 = vpop.permute.xlu0 %1176
      %1178 = vrot.lane.b32.xlu0 %v429, 34
      %v1179 = vpop.permute.xlu0 %1178
      %v1180 = vsel %vm639, %v1177, %v1179
      %v1184 = vmul.bf16 %v1170, %v1177
      %v1185 = vmul.bf16 %v1171, %v1180
      %v1186 = vmul.bf16 %v1172, %v1179
      %v1187 = vmul.bf16 %v1173, %v1177
      %v1188 = vmul.bf16 %v1174, %v1180
      %v1189 = vmul.bf16 %v1175, %v1179
      %1196 = vrot.lane.b32.xlu0 %v1184, 94
      %v1197 = vpop.permute.xlu0 %1196
      %1198 = vrot.lane.b32.xlu0 %v1185, 94
      %v1199 = vpop.permute.xlu0 %1198
      %1200 = vrot.lane.b32.xlu0 %v1186, 94
      %v1201 = vpop.permute.xlu0 %1200
      %1202 = vrot.lane.b32.xlu0 %v1187, 94
      %v1203 = vpop.permute.xlu0 %1202
      %1204 = vrot.lane.b32.xlu0 %v1188, 94
      %v1205 = vpop.permute.xlu0 %1204
      %1206 = vrot.lane.b32.xlu0 %v1189, 94
      %v1207 = vpop.permute.xlu0 %1206
      %v1208 = vsel %vm666, %v1197, %v1199
      %v1209 = vsel %vm666, %v1199, %v1201
      %v1210 = vsel %vm666, %v1203, %v1205
      %v1211 = vsel %vm666, %v1205, %v1207
      %1216 = vst [vmem:[#allocation5 + $0x100] sm:$0xff] %v1208
      %1217 = vst [vmem:[#allocation5 + $0x108] sm:$0xff] %v1209
      %1218 = vst [vmem:[#allocation5 + $0x110] sm:$0xff] %v1210
      %1219 = vst [vmem:[#allocation5 + $0x118] sm:$0xff] %v1211
      %v1220 = vld [vmem:[%s3] sm:$0xff]
      %v1221 = vld [vmem:[%s3 + $0x8] sm:$0xf]
      %v1222 = vld [vmem:[%s3 + $0xc] sm:$0xff]
      %v1223 = vld [vmem:[%s3 + $0x14] sm:$0xf]
      %v1224 = vld [vmem:[%s3 + $0x18] sm:$0xff]
      %v1225 = vld [vmem:[%s3 + $0x20] sm:$0xf]
      %v1226 = vld [vmem:[%s3 + $0x24] sm:$0xff]
      %v1227 = vld [vmem:[%s3 + $0x2c] sm:$0xf]
      %v1228 = vld [vmem:[#allocation5] sm:$0xff]
      %v1229 = vld [vmem:[#allocation5 + $0x8] sm:$0xff]
      %v1230 = vld [vmem:[#allocation5 + $0x10] sm:$0xff]
      %v1231 = vld [vmem:[#allocation5 + $0x18] sm:$0xff]
      %v1232 = vld [vmem:[#allocation5 + $0x20] sm:$0xff]
      %v1233 = vld [vmem:[#allocation5 + $0x28] sm:$0xff]
      %v1234 = vld [vmem:[#allocation5 + $0x30] sm:$0xff]
      %v1235 = vld [vmem:[#allocation5 + $0x38] sm:$0xff]
      %v1236 = vld [vmem:[#allocation5 + $0x40] sm:$0xff]
      %v1237 = vld [vmem:[#allocation5 + $0x48] sm:$0xff]
      %v1238 = vld [vmem:[#allocation5 + $0x50] sm:$0xff]
      %v1239 = vld [vmem:[#allocation5 + $0x58] sm:$0xff]
      %v1240 = vld [vmem:[#allocation5 + $0x60] sm:$0xff]
      %v1241 = vld [vmem:[#allocation5 + $0x68] sm:$0xff]
      %v1242 = vld [vmem:[#allocation5 + $0x70] sm:$0xff]
      %v1243 = vld [vmem:[#allocation5 + $0x78] sm:$0xff]
      %v1244 = vld [vmem:[#allocation5 + $0x80] sm:$0xff]
      %v1245 = vld [vmem:[#allocation5 + $0x88] sm:$0xff]
      %v1246 = vld [vmem:[#allocation5 + $0x90] sm:$0xff]
      %v1247 = vld [vmem:[#allocation5 + $0x98] sm:$0xff]
      %v1248 = vld [vmem:[#allocation5 + $0xa0] sm:$0xff]
      %v1249 = vld [vmem:[#allocation5 + $0xa8] sm:$0xff]
      %v1250 = vld [vmem:[#allocation5 + $0xb0] sm:$0xff]
      %v1251 = vld [vmem:[#allocation5 + $0xb8] sm:$0xff]
      %v1252 = vld [vmem:[#allocation5 + $0xc0] sm:$0xff]
      %v1253 = vld [vmem:[#allocation5 + $0xc8] sm:$0xff]
      %v1254 = vld [vmem:[#allocation5 + $0xd0] sm:$0xff]
      %v1255 = vld [vmem:[#allocation5 + $0xd8] sm:$0xff]
      %v1256 = vld [vmem:[#allocation5 + $0xe0] sm:$0xff]
      %v1257 = vld [vmem:[#allocation5 + $0xe8] sm:$0xff]
      %v1258 = vld [vmem:[#allocation5 + $0xf0] sm:$0xff]
      %v1259 = vld [vmem:[#allocation5 + $0xf8] sm:$0xff]
      %v1260 = vld [vmem:[#allocation5 + $0x100] sm:$0xff]
      %v1261 = vld [vmem:[#allocation5 + $0x108] sm:$0xff]
      %v1262 = vld [vmem:[#allocation5 + $0x110] sm:$0xff]
      %v1263 = vld [vmem:[#allocation5 + $0x118] sm:$0xff]
      %v1264 = vld [vmem:[%s4] sm:$0xff]
      %v1265 = vld [vmem:[%s4 + $0x8] sm:$0xff]
      %v1266 = vld [vmem:[%s4 + $0x10] sm:$0xff]
      %v1267 = vld [vmem:[%s4 + $0x18] sm:$0xff]
      %1269 = vset.pattern.permute.xlu0 0
      %1270 = vperm.xlu0 %1269, %v1264
      %v1271 = vpop.permute.xlu0 %1270
      %1274 = vset.pattern.permute.xlu0 0
      %1275 = vperm.xlu0 %1274, %v1265
      %v1276 = vpop.permute.xlu0 %1275
      %1279 = vset.pattern.permute.xlu0 0
      %1280 = vperm.xlu0 %1279, %v1266
      %v1281 = vpop.permute.xlu0 %1280
      %1284 = vset.pattern.permute.xlu0 0
      %1285 = vperm.xlu0 %1284, %v1267
      %v1286 = vpop.permute.xlu0 %1285
      %v1296 = vunpack.c.l.b16 %v1220
      %v1297 = vunpack.c.h.b16 %v1220
      %v1298 = vunpack.c.l.b16 %v1221
      %v1299 = vunpack.c.l.b16 %v1222
      %v1300 = vunpack.c.h.b16 %v1222
      %v1301 = vunpack.c.l.b16 %v1223
      %v1302 = vunpack.c.l.b16 %v1224
      %v1303 = vunpack.c.h.b16 %v1224
      %v1304 = vunpack.c.l.b16 %v1225
      %v1305 = vunpack.c.l.b16 %v1226
      %v1306 = vunpack.c.h.b16 %v1226
      %v1307 = vunpack.c.l.b16 %v1227
      %v1308 = vpack.c.b16 %v1299, %v1296
      %v1309 = vpack.c.b16 %v1300, %v1297
      %v1310 = vpack.c.b16 %v1301, %v1298
      %v1311 = vpack.c.b16 %v1305, %v1302
      %v1312 = vpack.c.b16 %v1306, %v1303
      %v1313 = vpack.c.b16 %v1307, %v1304
      %vm1318 = vcmask 261120
      %v1320 = vsel %vm1318, %v1310, 0
      %v1323 = vsel %vm1318, %v1313, 0
      %1325 = vmatprep.subr.bf16.mxu0 %v1229
      %1326 = vmatpush1.bf16.msra.mxu0 %v1228
      %1327 = vmatprep.subr.bf16.mxu0 %v1231
      %1328 = vmatpush1.bf16.msra.mxu0 %v1230
      %1329 = vmatprep.subr.bf16.mxu0 %v1233
      %1330 = vmatpush1.bf16.msra.mxu0 %v1232
      %1331 = vmatprep.subr.bf16.mxu0 %v1235
      %1332 = vmatpush1.bf16.msra.mxu0 %v1234
      %1333 = vmatprep.subr.bf16.mxu0 %v1237
      %1334 = vmatpush1.bf16.msra.mxu0 %v1236
      %1335 = vmatprep.subr.bf16.mxu0 %v1239
      %1336 = vmatpush1.bf16.msra.mxu0 %v1238
      %1337 = vmatprep.subr.bf16.mxu0 %v1241
      %1338 = vmatpush1.bf16.msra.mxu0 %v1240
      %1339 = vmatprep.subr.bf16.mxu0 %v1243
      %1340 = vmatpush1.bf16.msra.mxu0 %v1242
      %1341 = vmatprep.subr.bf16.mxu0 %v1245
      %1342 = vmatpush1.bf16.msra.mxu0 %v1244
      %1343 = vmatprep.subr.bf16.mxu0 %v1247
      %1344 = vmatpush1.bf16.msra.mxu0 %v1246
      %1345 = vmatprep.subr.bf16.mxu0 %v1249
      %1346 = vmatpush1.bf16.msra.mxu0 %v1248
      %1347 = vmatprep.subr.bf16.mxu0 %v1251
      %1348 = vmatpush1.bf16.msra.mxu0 %v1250
      %1349 = vmatprep.subr.bf16.mxu0 %v1253
      %1350 = vmatpush1.bf16.msra.mxu0 %v1252
      %1351 = vmatprep.subr.bf16.mxu0 %v1255
      %1352 = vmatpush1.bf16.msra.mxu0 %v1254
      %1353 = vmatprep.subr.bf16.mxu0 %v1257
      %1354 = vmatpush1.bf16.msra.mxu0 %v1256
      %1355 = vmatprep.subr.bf16.mxu0 %v1259
      %1356 = vmatpush1.bf16.msra.mxu0 %v1258
      %1357 = vmatprep.mubr.bf16.mxu0 %v1309
      %1358 = vmatmul.mubr.bf16.gmra.mrb[0].mxu0 %v1308
      %v1359 = vpop.f32.mrb[0].mxu0
      %v1360 = vadd.f32 %v1271, %v1359
      %v1361 = vpop.f32.mrb[0].mxu0
      %v1362 = vadd.f32 %v1271, %v1361
      %v1363 = vpop.f32.mrb[0].mxu0
      %v1364 = vadd.f32 %v1276, %v1363
      %v1365 = vpop.f32.mrb[0].mxu0
      %v1366 = vadd.f32 %v1276, %v1365
      %1367 = vmatprep.mubr.bf16.mxu0 %v1312
      %1368 = vmatmul.mubr.bf16.gmra.mrb[0].mxu0 %v1311
      %v1369 = vpop.f32.mrb[0].mxu0
      %v1370 = vadd.f32 %v1281, %v1369
      %v1371 = vpop.f32.mrb[0].mxu0
      %v1372 = vadd.f32 %v1281, %v1371
      %v1373 = vpop.f32.mrb[0].mxu0
      %v1374 = vadd.f32 %v1286, %v1373
      %v1375 = vpop.f32.mrb[0].mxu0
      %v1376 = vadd.f32 %v1286, %v1375
      %1377 = vdwg.mxu0
      %1378 = vmatprep.subr.bf16.mxu0 %v1261
      %1379 = vmatpush1.bf16.msra.mxu0 %v1260
      %1380 = vmatprep.subr.bf16.mxu0 %v1263
      %1381 = vmatpush1.bf16.msra.mxu0 %v1262
      %1382 = vmatprep.subr.bf16.mxu0 0
      %1383 = vmatpush1.bf16.msra.mxu0 0
      %1384 = vmatprep.subr.bf16.mxu0 0
      %1385 = vmatpush1.bf16.msra.mxu0 0
      %1386 = vmatprep.subr.bf16.mxu0 0
      %1387 = vmatpush1.bf16.msra.mxu0 0
      %1388 = vmatprep.subr.bf16.mxu0 0
      %1389 = vmatpush1.bf16.msra.mxu0 0
      %1390 = vmatprep.subr.bf16.mxu0 0
      %1391 = vmatpush1.bf16.msra.mxu0 0
      %1392 = vmatprep.subr.bf16.mxu0 0
      %1393 = vmatpush1.bf16.msra.mxu0 0
      %1394 = vmatprep.subr.bf16.mxu0 0
      %1395 = vmatpush1.bf16.msra.mxu0 0
      %1396 = vmatprep.subr.bf16.mxu0 0
      %1397 = vmatpush1.bf16.msra.mxu0 0
      %1398 = vmatprep.subr.bf16.mxu0 0
      %1399 = vmatpush1.bf16.msra.mxu0 0
      %1400 = vmatprep.subr.bf16.mxu0 0
      %1401 = vmatpush1.bf16.msra.mxu0 0
      %1402 = vmatprep.subr.bf16.mxu0 0
      %1403 = vmatpush1.bf16.msra.mxu0 0
      %1404 = vmatprep.subr.bf16.mxu0 0
      %1405 = vmatpush1.bf16.msra.mxu0 0
      %1406 = vmatprep.subr.bf16.mxu0 0
      %1407 = vmatpush1.bf16.msra.mxu0 0
      %1408 = vmatprep.subr.bf16.mxu0 0
      %1409 = vmatpush1.bf16.msra.mxu0 0
      %1410 = vmatprep.mubr.bf16.mxu0 0
      %1411 = vmatmul.mubr.bf16.gmra.mrb[0].mxu0 %v1320
      %v1412 = vpop.f32.mrb[0].mxu0
      %v1413 = vadd.f32 %v1360, %v1412
      %v1414 = vpop.f32.mrb[0].mxu0
      %v1415 = vadd.f32 %v1362, %v1414
      %v1416 = vpop.f32.mrb[0].mxu0
      %v1417 = vadd.f32 %v1364, %v1416
      %v1418 = vpop.f32.mrb[0].mxu0
      %v1419 = vadd.f32 %v1366, %v1418
      %1420 = vmatprep.mubr.bf16.mxu0 0
      %1421 = vmatmul.mubr.bf16.gmra.mrb[0].mxu0 %v1323
      %v1422 = vpop.f32.mrb[0].mxu0
      %v1423 = vadd.f32 %v1370, %v1422
      %v1424 = vpop.f32.mrb[0].mxu0
      %v1425 = vadd.f32 %v1372, %v1424
      %v1426 = vpop.f32.mrb[0].mxu0
      %v1427 = vadd.f32 %v1374, %v1426
      %v1428 = vpop.f32.mrb[0].mxu0
      %v1429 = vadd.f32 %v1376, %v1428
      %1430 = vdwg.mxu0
      %v1431 = vmax.f32 %v1413, 0.0
      %v1432 = vmax.f32 %v1415, 0.0
      %v1433 = vmax.f32 %v1417, 0.0
      %v1434 = vmax.f32 %v1419, 0.0
      %v1435 = vmax.f32 %v1423, 0.0
      %v1436 = vmax.f32 %v1425, 0.0
      %v1437 = vmax.f32 %v1427, 0.0
      %v1438 = vmax.f32 %v1429, 0.0
      %v1439 = vld [vmem:[%s5] sm:$0x3]
      %v1440 = vpack.c.bf16 %v1433, %v1431
      %v1441 = vpack.c.bf16 %v1434, %v1432
      %v1442 = vpack.c.bf16 %v1437, %v1435
      %v1443 = vpack.c.bf16 %v1438, %v1436
      %v1444 = vld [vmem:[%s6] sm:$0x7]
      %1446 = vset.pattern.permute.xlu0 0
      %1447 = vperm.xlu0 %1446, %v1444
      %v1448 = vpop.permute.xlu0 %1447
      %v1451 = vsel %vm1318, %v1439, 0
      %1453 = vmatprep.subr.bf16.mxu0 %v1441
      %1454 = vmatpush1.bf16.msra.mxu0 %v1440
      %1455 = vmatprep.subr.bf16.mxu0 %v1443
      %1456 = vmatpush1.bf16.msra.mxu0 %v1442
      %1457 = vmatprep.subr.bf16.mxu0 0
      %1458 = vmatpush1.bf16.msra.mxu0 0
      %1459 = vmatprep.subr.bf16.mxu0 0
      %1460 = vmatpush1.bf16.msra.mxu0 0
      %1461 = vmatprep.subr.bf16.mxu0 0
      %1462 = vmatpush1.bf16.msra.mxu0 0
      %1463 = vmatprep.subr.bf16.mxu0 0
      %1464 = vmatpush1.bf16.msra.mxu0 0
      %1465 = vmatprep.subr.bf16.mxu0 0
      %1466 = vmatpush1.bf16.msra.mxu0 0
      %1467 = vmatprep.subr.bf16.mxu0 0
      %1468 = vmatpush1.bf16.msra.mxu0 0
      %1469 = vmatprep.subr.bf16.mxu0 0
      %1470 = vmatpush1.bf16.msra.mxu0 0
      %1471 = vmatprep.subr.bf16.mxu0 0
      %1472 = vmatpush1.bf16.msra.mxu0 0
      %1473 = vmatprep.subr.bf16.mxu0 0
      %1474 = vmatpush1.bf16.msra.mxu0 0
      %1475 = vmatprep.subr.bf16.mxu0 0
      %1476 = vmatpush1.bf16.msra.mxu0 0
      %1477 = vmatprep.subr.bf16.mxu0 0
      %1478 = vmatpush1.bf16.msra.mxu0 0
      %1479 = vmatprep.subr.bf16.mxu0 0
      %1480 = vmatpush1.bf16.msra.mxu0 0
      %1481 = vmatprep.subr.bf16.mxu0 0
      %1482 = vmatpush1.bf16.msra.mxu0 0
      %1483 = vmatprep.subr.bf16.mxu0 0
      %1484 = vmatpush1.bf16.msra.mxu0 0
      %1485 = vmatprep.mubr.bf16.mxu0 0
      %1486 = vmatmul.mubr.bf16.gmra.mrb[0].mxu0 %v1451
      %v1487 = vpop.f32.mrb[0].mxu0
      %v1488 = vadd.f32 %v1448, %v1487
      %v1489 = vpop.f32.mrb[0].mxu0
      %v1490 = vadd.f32 %v1448, %v1489
      %v1491 = vpop.f32.mrb[0].mxu0
      %v1492 = vpop.f32.mrb[0].mxu0
      %1493 = vdwg.mxu0
      %v1496 = vcombine.low %v1488, %v1490
      %1498 = vst [vmem:[%s305] sm:$0x77] %v1496
      %p1499 = scmp.lt.s32.totalorder %s19, 1
      %s1500 = scalar_select %p1499, %s19, 1
      %s1501 = smul.addr %s1500, 2
      %s1502 = smul.addr %s1501, 4
      %s1503 = scalar_lea.vmem %s8, %s1502
      // Predicated region
      $region53: #{final_block.1} parent=51 // pred_check
        %p1504 = pneg %p210
      $region54: #{final_block.1} parent=51 // pred_check_branch
        %1506 = sbr.rel (%p1504) target = $region56
      $region55: #{final_block.1} parent=51 // pred_region
        _
      $region56: #{final_block.1} parent=51 // pred_fallthru
        _
    $region52: #{final_block.1} parent=5 // pred_fallthru
      _
    %p1507 = scmp.le.s32.totalorder 2, %s14
    // Predicated region
    $region57: #{final_block.1} parent=5 // pred_check
      %p1508 = pneg %p1507
    $region58: #{final_block.1} parent=5 // pred_check_branch
      %1510 = sbr.rel (%p1508) target = $region60
    $region59: #{final_block.1} parent=5 // pred_region
      %s1511 = ssub.s32 %s14, 2
      // Predicated region
      $region61: #{final_block.1} parent=59 // pred_check
        %p1512 = pneg %p216
      $region62: #{final_block.1} parent=59 // pred_check_branch
        %1514 = sbr.rel (%p1512) target = $region64
      $region63: #{final_block.1} parent=59 // pred_region
        %p1515 = scmp.lt.s32.totalorder %s20, 1
        %s1516 = scalar_select %p1515, %s20, 1
        %s1517 = smul.addr %s1516, 2
        %s1518 = smul.addr %s1517, 4
        %s1519 = scalar_lea.vmem %s8, %s1518
      $region64: #{final_block.1} parent=59 // pred_fallthru
        _
    $region60: #{final_block.1} parent=5 // pred_fallthru
      _
  $region6: #{final_block.1} parent=0 // loop_footer
    %s18 = sadd.s32 1, %s14
  $region7: #{final_block.1} parent=0 // loop_footer_branch
    %13 = sbr.rel target = $region3
  $region8: #{final_block.1} parent=0 // loop_exit
    _

</llo_original>
